<compile_context>
chip_gen: v7x
topology: tpu7x:2x2x1
jax: 0.10.0
libtpu: 0.0.40
codegen_flags: <defaults>
</compile_context>

<pallas_src>
import math

import jax
import jax.numpy as jnp
from jax.experimental import pallas as pl
from jax.experimental.pallas import tpu as pltpu

EPS = 1e-6  # config.layer_norm_epsilon
_BF16 = jnp.bfloat16
_F32 = jnp.float32


def _dot_nt(a, b):
    """a @ b.T without materializing the transpose (MXU-native NT matmul, f32 accumulation)."""
    return jax.lax.dot_general(a, b, (((1,), (1,)), ((), ())),
                               preferred_element_type=_F32)


def _bspec(shape, index_map, *, single=False):
    """BlockSpec; single=True requests single-buffering for grid-invariant blocks."""
    if single:
        try:
            return pl.BlockSpec(shape, index_map, pipeline_mode=pl.Buffered(1))
        except Exception:  # older jax without pipeline_mode / Buffered
            pass
    return pl.BlockSpec(shape, index_map)


def _vmem_limit_bytes():
    """Generation-aware VMEM cap: ~85% of physical, conservative 64 MiB fallback."""
    cap = 0
    try:
        cap = getattr(pltpu.get_tpu_info(), "vmem_capacity_bytes", 0)
    except Exception:
        cap = 0
    if not cap:
        cap = 64 * 1024 * 1024          # safe on every generation (v7x physical)
    return int(min(cap * 85 // 100, 110 * 1024 * 1024))


# --------------------------------------------------------------------------------------
# Attention + residual.  Grid = (batch, head); per-head Wo contributions accumulate into
# a f32 VMEM scratch (P3 init/finalize with pl.when).
# --------------------------------------------------------------------------------------
def _attn_kernel(x_ref, cos_ref, sin_ref, anw_ref, wqkv_ref, wo_ref,
                 h1_ref, xn_ref, acc_ref):
    h = pl.program_id(1)
    nh = pl.num_programs(1)
    hd = wo_ref.shape[1]
    hd2 = hd // 2
    scale = 1.0 / math.sqrt(hd)

    # ---- hoisted per-batch work (h == 0): RMSNorm(x) -> bf16 scratch, zero accumulator ----
    @pl.when(h == 0)
    def _():
        x = x_ref[0]                                                   # (S, D) f32
        var = jnp.mean(x * x, axis=-1, keepdims=True)
        xn_ref[...] = (x * jax.lax.rsqrt(var + EPS) * anw_ref[...]).astype(_BF16)
        acc_ref[...] = jnp.zeros_like(acc_ref)

    xn = xn_ref[...]                                                   # (S, D) bf16

    # ---- fused per-head projection: one (S,D)@(D,3*hd) matmul -> [q_cat | k_cat | v] ----
    qkv = jnp.dot(xn, wqkv_ref[0], preferred_element_type=_F32)        # (S, 3*hd) f32
    q = qkv[:, :hd] * scale          # de-interleaved [even|odd]; 1/sqrt(hd) folded in once
    k = qkv[:, hd:2 * hd]
    v = qkv[:, 2 * hd:].astype(_BF16)                                  # (S, hd)

    # ---- RoPE on the concatenated-half layout (element-wise on full-width tiles) ----
    # out = t * [cos|cos] + half_swap(t) * [-sin|sin]   (half-swap == roll by hd/2)
    cos = cos_ref[...]                                                 # (S, hd)
    sin = sin_ref[...]                                                 # (S, hd)
    q_sw = jnp.concatenate([q[:, hd2:], q[:, :hd2]], axis=-1)
    k_sw = jnp.concatenate([k[:, hd2:], k[:, :hd2]], axis=-1)
    q_rot = (q * cos + q_sw * sin).astype(_BF16)
    k_rot = (k * cos + k_sw * sin).astype(_BF16)

    # ---- scores: single full-depth (K = hd) NT matmul, f32 accumulation ----
    s = _dot_nt(q_rot, k_rot)                                          # (S, S) f32

    # ---- causal mask generated in-kernel (start_pos = 0) ----
    S = s.shape[0]
    row = jax.lax.broadcasted_iota(jnp.int32, (S, S), 0)
    col = jax.lax.broadcasted_iota(jnp.int32, (S, S), 1)
    s = jnp.where(col <= row, s, -1e30)

    # ---- explicit softmax: stats in f32, row divide on the EUP via approx reciprocal ----
    m = jnp.max(s, axis=-1, keepdims=True)
    e = jnp.exp(s - m)
    l = jnp.sum(e, axis=-1, keepdims=True)
    p = (e * pl.reciprocal(l, approx=True)).astype(_BF16)

    ctx = jnp.dot(p, v, preferred_element_type=_F32).astype(_BF16)     # (S, hd)

    # concat-over-heads @ Wo == sum_h ctx_h @ Wo[h*hd:(h+1)*hd, :]
    acc_ref[...] += jnp.dot(ctx, wo_ref[0], preferred_element_type=_F32)   # (S, D) f32

    @pl.when(h == nh - 1)
    def _():
        h1_ref[0] = x_ref[0] + acc_ref[...]                            # residual in f32


# --------------------------------------------------------------------------------------
# SwiGLU FFN + residual.  Grid = (batch, hid_block); accumulates into the resident output
# block; [w1|w3] fused per hid block so hn passes through the MXU once per block.
# --------------------------------------------------------------------------------------
def _ffn_kernel(h_ref, fnw_ref, w13_ref, w2_ref, out_ref, hn_ref):
    k = pl.program_id(1)
    t_hid = w2_ref.shape[0]

    @pl.when(k == 0)
    def _():
        hres = h_ref[0]                                                # (S, D) f32
        var = jnp.mean(hres * hres, axis=-1, keepdims=True)
        hn_ref[...] = (hres * jax.lax.rsqrt(var + EPS) * fnw_ref[...]).astype(_BF16)
        out_ref[0] = hres                                              # residual init

    hn = hn_ref[...]                                                   # (S, D) bf16
    ab = jnp.dot(hn, w13_ref[...], preferred_element_type=_F32)        # (S, 2*t_hid): [w1|w3]
    a = ab[:, :t_hid]
    b = ab[:, t_hid:]
    g = (a * jax.nn.sigmoid(a) * b).astype(_BF16)                      # SiLU(a) * b in f32
    out_ref[0] += jnp.dot(g, w2_ref[...], preferred_element_type=_F32)


# --------------------------------------------------------------------------------------
# One-time (load-time) weight preprocessing — do NOT call per forward step.
# --------------------------------------------------------------------------------------
def _pick_t_hid(hid):
    """Largest 'nice' hid tile (multiple of 64) dividing hid; fallback: untiled."""
    for cand in (2048, 1536, 1024, 768, 512, 384, 256, 128):
        if hid % cand == 0:
            return cand
    return hid


def prepare_llama_block_params(params, n_head, t_hid=None):
    D = params["wq"].shape[0]
    hid = params["w1"].shape[1]
    hd = D // n_head
    if t_hid is None:
        t_hid = _pick_t_hid(hid)
    nb = hid // t_hid

    # Per-head QKV weights fused into one (H, D, 3*hd) RHS.  Q/K output columns are
    # de-interleaved ([even | odd]) so RoPE is element-wise on concatenated halves; scores
    # are invariant to this permutation as long as Q and K use the same one.
    perm = jnp.concatenate([jnp.arange(0, hd, 2), jnp.arange(1, hd, 2)])
    wq = params["wq"].reshape(D, n_head, hd)[:, :, perm]
    wk = params["wk"].reshape(D, n_head, hd)[:, :, perm]
    wv = params["wv"].reshape(D, n_head, hd)
    wqkv = jnp.concatenate([wq, wk, wv], axis=2).transpose(1, 0, 2).astype(_BF16)  # (H, D, 3*hd)
    wo = params["wo"].reshape(n_head, hd, D).astype(_BF16)                          # (H, hd, D)

    # FFN: fuse w1|w3 block-interleaved along hid so a (D, 2*t_hid) block k holds
    # [w1 block k | w3 block k].
    w13 = jnp.concatenate(
        [params["w1"].reshape(D, nb, t_hid), params["w3"].reshape(D, nb, t_hid)],
        axis=2).reshape(D, 2 * hid).astype(_BF16)
    w2 = params["w2"].astype(_BF16)                                                 # (hid, D)

    return {
        "wqkv": wqkv, "wo": wo, "w13": w13, "w2": w2,
        "anw": params["attn_norm_w"].reshape(1, D).astype(_F32),
        "fnw": params["ffn_norm_w"].reshape(1, D).astype(_F32),
        "n_head": n_head, "head_dim": hd, "hid": hid, "t_hid": t_hid,
    }


# --------------------------------------------------------------------------------------
# Block forward wrapper (two pallas_calls so attention and FFN weights are never
# VMEM-resident at the same time).
# --------------------------------------------------------------------------------------
def llama_block(x, prepped, freqs_cos, freqs_sin, *, single_buffer=True):
    """x: (B, S, D) f32.  freqs_cos/sin: (S, head_dim//2) f32.  Causal, start_pos = 0."""
    B, S, D = x.shape
    H = prepped["n_head"]
    hd = prepped["head_dim"]
    hid = prepped["hid"]
    t_hid = prepped["t_hid"]
    nb = hid // t_hid
    vmem_limit = _vmem_limit_bytes()

    def bspec(shape, imap, grid_invariant=False):
        return _bspec(shape, imap, single=(single_buffer and grid_invariant))

    # RoPE tables in the concatenated-half layout: [cos|cos] and [-sin|sin], (S, hd) f32.
    cos_cat = jnp.concatenate([freqs_cos, freqs_cos], axis=-1).astype(_F32)
    sin_sig = jnp.concatenate([-freqs_sin, freqs_sin], axis=-1).astype(_F32)

    # ---------------- call 1: attention + residual, grid = (B, H) ----------------
    attn_spec = pltpu.PrefetchScalarGridSpec(
        num_scalar_prefetch=0,
        grid=(B, H),
        in_specs=[
            pl.BlockSpec((1, S, D), lambda b, h: (b, 0, 0)),              # x
            bspec((S, hd), lambda b, h: (0, 0), grid_invariant=True),     # [cos | cos]
            bspec((S, hd), lambda b, h: (0, 0), grid_invariant=True),     # [-sin | sin]
            bspec((1, D), lambda b, h: (0, 0), grid_invariant=True),      # attention_norm w
            pl.BlockSpec((1, D, 3 * hd), lambda b, h: (h, 0, 0)),         # fused per-head [q|k|v]
            pl.BlockSpec((1, hd, D), lambda b, h: (h, 0, 0)),             # per-head Wo rows
        ],
        out_specs=pl.BlockSpec((1, S, D), lambda b, h: (b, 0, 0)),
        scratch_shapes=[pltpu.VMEM((S, D), _BF16),                        # hoisted RMSNorm(x)
                        pltpu.VMEM((S, D), _F32)],                        # Wo accumulator
    )
    h1 = pl.pallas_call(
        _attn_kernel,
        out_shape=jax.ShapeDtypeStruct((B, S, D), _F32),
        grid_spec=attn_spec,
        compiler_params=pltpu.CompilerParams(
            dimension_semantics=("parallel", "arbitrary"),
            vmem_limit_bytes=vmem_limit),
    )(x, cos_cat, sin_sig, prepped["anw"], prepped["wqkv"], prepped["wo"])

    # ---------------- call 2: SwiGLU FFN + residual, grid = (B, hid blocks) ----------------
    w_inv = (nb == 1)   # FFN weights are grid-invariant only when hid is untiled
    ffn_spec = pltpu.PrefetchScalarGridSpec(
        num_scalar_prefetch=0,
        grid=(B, nb),
        in_specs=[
            pl.BlockSpec((1, S, D), lambda b, k: (b, 0, 0)),              # h1
            bspec((1, D), lambda b, k: (0, 0), grid_invariant=True),      # ffn_norm weight
            bspec((D, 2 * t_hid), lambda b, k: (0, k), grid_invariant=w_inv),   # [w1|w3] block
            bspec((t_hid, D), lambda b, k: (k, 0), grid_invariant=w_inv),       # w2 block
        ],
        out_specs=pl.BlockSpec((1, S, D), lambda b, k: (b, 0, 0)),
        scratch_shapes=[pltpu.VMEM((S, D), _BF16)],                       # hoisted RMSNorm(h1)
    )
    out = pl.pallas_call(
        _ffn_kernel,
        out_shape=jax.ShapeDtypeStruct((B, S, D), _F32),
        grid_spec=ffn_spec,
        compiler_params=pltpu.CompilerParams(
            dimension_semantics=("parallel", "arbitrary"),
            vmem_limit_bytes=vmem_limit),
    )(h1, prepped["fnw"], prepped["w13"], prepped["w2"])
    return out


# --------------------------------------------------------------------------------------
# Pure-JAX f32 reference mirroring the PyTorch forward (non-inference path).
# --------------------------------------------------------------------------------------
def ref_llama_block(x, params, freqs_cos, freqs_sin, n_head):
    B, S, D = x.shape
    hd = D // n_head

    def rms(t, w):
        return t * jax.lax.rsqrt(jnp.mean(t * t, -1, keepdims=True) + EPS) * w

    def rope(t):  # t: (B, S, H, hd), interleaved complex rotation
        te, to = t[..., 0::2], t[..., 1::2]
        c = freqs_cos[None, :, None, :]
        s = freqs_sin[None, :, None, :]
        oe = te * c - to * s
        oo = te * s + to * c
        return jnp.stack([oe, oo], axis=-1).reshape(t.shape)

    mask = jnp.where(jnp.arange(S)[:, None] >= jnp.arange(S)[None, :], 0.0, -1e30)
    xn = rms(x, params["attn_norm_w"])
    q = (xn @ params["wq"]).reshape(B, S, n_head, hd)
    k = (xn @ params["wk"]).reshape(B, S, n_head, hd)
    v = (xn @ params["wv"]).reshape(B, S, n_head, hd)
    q, k = rope(q), rope(k)
    q, k, v = (a.transpose(0, 2, 1, 3) for a in (q, k, v))
    s = q @ k.transpose(0, 1, 3, 2) / math.sqrt(hd) + mask[None, None]
    p = jax.nn.softmax(s, axis=-1)
    o = (p @ v).transpose(0, 2, 1, 3).reshape(B, S, D)
    h = x + o @ params["wo"]
    hn = rms(h, params["ffn_norm_w"])
    a = hn @ params["w1"]
    ff = (a * jax.nn.sigmoid(a) * (hn @ params["w3"])) @ params["w2"]
    return h + ff


if __name__ == "__main__":
    # small config consistent with the module: hidden=32, heads=4, seq=8, batch=2
    B, S, D, H = 2, 8, 32, 4
    multiple_of = 32
    hid = int(2 * (4 * D) / 3)
    hid = multiple_of * ((hid + multiple_of - 1) // multiple_of)   # SwiGLU hidden = 96
    hd = D // H
    start_pos = 0

    key = jax.random.PRNGKey(0)
    ks = jax.random.split(key, 8)
    init = lambda k, shape: 0.05 * jax.random.normal(k, shape, jnp.float32)
    # linear weights stored pre-transposed as (in_features, out_features): y = x @ W
    params = {
        "wq": init(ks[0], (D, D)), "wk": init(ks[1], (D, D)),
        "wv": init(ks[2], (D, D)), "wo": init(ks[3], (D, D)),
        "w1": init(ks[4], (D, hid)), "w2": init(ks[5], (hid, D)),
        "w3": init(ks[6], (D, hid)),
        "attn_norm_w": jnp.ones((D,), jnp.float32),
        "ffn_norm_w": jnp.ones((D,), jnp.float32),
    }
    x = jax.random.normal(ks[7], (B, S, D), jnp.float32)

    # precompute_freqs_cis equivalent (theta = 10000), positions [start_pos, start_pos+S)
    inv_freq = 1.0 / (10000.0 ** (jnp.arange(0, hd, 2, dtype=jnp.float32) / hd))
    t = jnp.arange(start_pos, start_pos + S, dtype=jnp.float32)
    angles = jnp.outer(t, inv_freq)                 # (S, hd//2)
    freqs_cos, freqs_sin = jnp.cos(angles), jnp.sin(angles)

    prepped = prepare_llama_block_params(params, H)   # one-time, load-time weight prep

    try:
        out = jax.block_until_ready(llama_block(x, prepped, freqs_cos, freqs_sin))
    except Exception:
        # fall back without single-buffered grid-invariant blocks (older jax / lowering limits)
        out = jax.block_until_ready(
            llama_block(x, prepped, freqs_cos, freqs_sin, single_buffer=False))

    ref = ref_llama_block(x, params, freqs_cos, freqs_sin, H)
    # bf16 matmuls (f32 accumulation) + approx reciprocal vs. the f32 reference
    assert jnp.allclose(out, ref, atol=2e-2, rtol=2e-2), float(jnp.max(jnp.abs(out - ref)))
    print("KERNEL_OK")
</pallas_src>

<mosaic_0001>
module attributes {stable_mosaic.version = 11 : i64} {
  func.func @_attn_kernel(%arg0: i32, %arg1: i32, %arg2: memref<1x8x32xf32, #tpu.memory_space<vmem>>, %arg3: memref<8x8xf32, #tpu.memory_space<vmem>>, %arg4: memref<8x8xf32, #tpu.memory_space<vmem>>, %arg5: memref<1x32xf32, #tpu.memory_space<vmem>>, %arg6: memref<1x32x24xbf16, #tpu.memory_space<vmem>>, %arg7: memref<1x8x32xbf16, #tpu.memory_space<vmem>>, %arg8: memref<1x8x32xf32, #tpu.memory_space<vmem>>, %arg9: memref<8x32xbf16, #tpu.memory_space<vmem>>, %arg10: memref<8x32xf32, #tpu.memory_space<vmem>>) attributes {dimension_semantics = [#tpu.dimension_semantics<parallel>, #tpu.dimension_semantics<arbitrary>], iteration_bounds = array<i64: 2, 4>, scalar_prefetch = 0 : i64, scratch_operands = 2 : i64, tpu.core_type = #tpu.core_type<tc>, window_params = [{transform_indices = @transform_0, window_bounds = array<i64: 1, 8, 32>}, {pipeline_mode = #tpu.pipeline_mode<synchronous>, transform_indices = @transform_1, window_bounds = array<i64: 8, 8>}, {pipeline_mode = #tpu.pipeline_mode<synchronous>, transform_indices = @transform_2, window_bounds = array<i64: 8, 8>}, {pipeline_mode = #tpu.pipeline_mode<synchronous>, transform_indices = @transform_3, window_bounds = array<i64: 1, 32>}, {transform_indices = @transform_4, window_bounds = array<i64: 1, 32, 24>}, {transform_indices = @transform_5, window_bounds = array<i64: 1, 8, 32>}, {transform_indices = @transform_6, window_bounds = array<i64: 1, 8, 32>}]} {
    %c0_i32 = arith.constant 0 : i32
    %0 = arith.cmpi eq, %arg1, %c0_i32 : i32
    %1 = arith.extui %0 : i1 to i32
    %c0_i32_0 = arith.constant 0 : i32
    %2 = arith.cmpi ne, %1, %c0_i32_0 : i32
    scf.if %2 {
      %c0_24 = arith.constant 0 : index
      %c0_25 = arith.constant 0 : index
      %c0_26 = arith.constant 0 : index
      %57 = vector.load %arg2[%c0_24, %c0_25, %c0_26] : memref<1x8x32xf32, #tpu.memory_space<vmem>>, vector<1x8x32xf32>
      %58 = vector.shape_cast %57 : vector<1x8x32xf32> to vector<8x32xf32>
      %59 = arith.mulf %58, %58 : vector<8x32xf32>
      %cst_27 = arith.constant dense<0.000000e+00> : vector<8xf32>
      %60 = vector.multi_reduction <add>, %59, %cst_27 [1] : vector<8x32xf32> to vector<8xf32>
      %61 = vector.shape_cast %60 : vector<8xf32> to vector<8x1xf32>
      %cst_28 = arith.constant 3.200000e+01 : f32
      %62 = vector.broadcast %cst_28 : f32 to vector<8x1xf32>
      %63 = arith.divf %61, %62 : vector<8x1xf32>
      %cst_29 = arith.constant 9.99999997E-7 : f32
      %64 = vector.broadcast %cst_29 : f32 to vector<8x1xf32>
      %65 = arith.addf %63, %64 : vector<8x1xf32>
      %66 = math.rsqrt %65 : vector<8x1xf32>
      %67 = vector.broadcast %66 : vector<8x1xf32> to vector<8x32xf32>
      %68 = arith.mulf %58, %67 : vector<8x32xf32>
      %c0_30 = arith.constant 0 : index
      %c0_31 = arith.constant 0 : index
      %69 = vector.load %arg5[%c0_30, %c0_31] : memref<1x32xf32, #tpu.memory_space<vmem>>, vector<1x32xf32>
      %70 = vector.broadcast %69 : vector<1x32xf32> to vector<8x32xf32>
      %71 = arith.mulf %68, %70 : vector<8x32xf32>
      %72 = arith.truncf %71 : vector<8x32xf32> to vector<8x32xbf16>
      %c0_32 = arith.constant 0 : index
      %c0_33 = arith.constant 0 : index
      %73 = vector.load %arg9[%c0_32, %c0_33] : memref<8x32xbf16, #tpu.memory_space<vmem>>, vector<8x32xbf16>
      tpu.vector_store %arg9[%c0_32, %c0_33], %72 {strides = array<i32>} : memref<8x32xbf16, #tpu.memory_space<vmem>>, vector<8x32xbf16>,
      %cst_34 = arith.constant 0.000000e+00 : f32
      %74 = vector.broadcast %cst_34 : f32 to vector<8x32xf32>
      %c0_35 = arith.constant 0 : index
      %c0_36 = arith.constant 0 : index
      %75 = vector.load %arg10[%c0_35, %c0_36] : memref<8x32xf32, #tpu.memory_space<vmem>>, vector<8x32xf32>
      tpu.vector_store %arg10[%c0_35, %c0_36], %74 {strides = array<i32>} : memref<8x32xf32, #tpu.memory_space<vmem>>, vector<8x32xf32>,
    } else {
    }
    %c0 = arith.constant 0 : index
    %c0_1 = arith.constant 0 : index
    %3 = vector.load %arg9[%c0, %c0_1] : memref<8x32xbf16, #tpu.memory_space<vmem>>, vector<8x32xbf16>
    %c0_2 = arith.constant 0 : index
    %c0_3 = arith.constant 0 : index
    %c0_4 = arith.constant 0 : index
    %4 = vector.load %arg6[%c0_2, %c0_3, %c0_4] : memref<1x32x24xbf16, #tpu.memory_space<vmem>>, vector<1x32x24xbf16>
    %5 = vector.shape_cast %4 : vector<1x32x24xbf16> to vector<32x24xbf16>
    %cst = arith.constant dense<0.000000e+00> : vector<8x24xf32>
    %6 = tpu.matmul %3, %5, %cst {dimension_numbers = #tpu.dot_dimension_numbers<[1], [0], [0], [1], [0, 0, 1, 1], [], []>} : vector<8x32xbf16>, vector<32x24xbf16>, vector<8x24xf32> -> vector<8x24xf32>
    %7 = vector.extract_strided_slice %6 {offsets = [0, 0], sizes = [8, 8], strides = [1, 1]} : vector<8x24xf32> to vector<8x8xf32>
    %cst_5 = arith.constant 0.353553385 : f32
    %8 = vector.broadcast %cst_5 : f32 to vector<8x8xf32>
    %9 = arith.mulf %7, %8 : vector<8x8xf32>
    %10 = vector.extract_strided_slice %6 {offsets = [0, 8], sizes = [8, 8], strides = [1, 1]} : vector<8x24xf32> to vector<8x8xf32>
    %11 = vector.extract_strided_slice %6 {offsets = [0, 16], sizes = [8, 8], strides = [1, 1]} : vector<8x24xf32> to vector<8x8xf32>
    %12 = arith.truncf %11 : vector<8x8xf32> to vector<8x8xbf16>
    %c0_6 = arith.constant 0 : index
    %c0_7 = arith.constant 0 : index
    %13 = vector.load %arg3[%c0_6, %c0_7] : memref<8x8xf32, #tpu.memory_space<vmem>>, vector<8x8xf32>
    %c0_8 = arith.constant 0 : index
    %c0_9 = arith.constant 0 : index
    %14 = vector.load %arg4[%c0_8, %c0_9] : memref<8x8xf32, #tpu.memory_space<vmem>>, vector<8x8xf32>
    %15 = vector.extract_strided_slice %9 {offsets = [0, 4], sizes = [8, 4], strides = [1, 1]} : vector<8x8xf32> to vector<8x4xf32>
    %16 = vector.extract_strided_slice %9 {offsets = [0, 0], sizes = [8, 4], strides = [1, 1]} : vector<8x8xf32> to vector<8x4xf32>
    %17 = tpu.concatenate %15, %16 in 1 : vector<8x4xf32>, vector<8x4xf32> -> vector<8x8xf32>
    %18 = vector.extract_strided_slice %10 {offsets = [0, 4], sizes = [8, 4], strides = [1, 1]} : vector<8x8xf32> to vector<8x4xf32>
    %19 = vector.extract_strided_slice %10 {offsets = [0, 0], sizes = [8, 4], strides = [1, 1]} : vector<8x8xf32> to vector<8x4xf32>
    %20 = tpu.concatenate %18, %19 in 1 : vector<8x4xf32>, vector<8x4xf32> -> vector<8x8xf32>
    %21 = arith.mulf %9, %13 : vector<8x8xf32>
    %22 = arith.mulf %17, %14 : vector<8x8xf32>
    %23 = arith.addf %21, %22 : vector<8x8xf32>
    %24 = arith.truncf %23 : vector<8x8xf32> to vector<8x8xbf16>
    %25 = arith.mulf %10, %13 : vector<8x8xf32>
    %26 = arith.mulf %20, %14 : vector<8x8xf32>
    %27 = arith.addf %25, %26 : vector<8x8xf32>
    %28 = arith.truncf %27 : vector<8x8xf32> to vector<8x8xbf16>
    %cst_10 = arith.constant dense<0.000000e+00> : vector<8x8xf32>
    %29 = tpu.matmul %24, %28, %cst_10 {dimension_numbers = #tpu.dot_dimension_numbers<[1], [1], [0], [0], [0, 0, 1, 0], [], []>} : vector<8x8xbf16>, vector<8x8xbf16>, vector<8x8xf32> -> vector<8x8xf32>
    %30 = tpu.iota {dimensions = array<i32: 0>} : vector<8x8xi32>
    %31 = tpu.iota {dimensions = array<i32: 1>} : vector<8x8xi32>
    %32 = arith.cmpi sle, %31, %30 : vector<8x8xi32>
    %cst_11 = arith.constant -1.000000e+30 : f32
    %33 = vector.broadcast %cst_11 : f32 to vector<8x8xf32>
    %34 = arith.select %32, %29, %33 : vector<8x8xi1>, vector<8x8xf32>
    %cst_12 = arith.constant dense<0xFF800000> : vector<8xf32>
    %35 = vector.multi_reduction <maximumf>, %34, %cst_12 [1] : vector<8x8xf32> to vector<8xf32>
    %36 = vector.shape_cast %35 : vector<8xf32> to vector<8x1xf32>
    %37 = vector.broadcast %36 : vector<8x1xf32> to vector<8x8xf32>
    %38 = arith.subf %34, %37 : vector<8x8xf32>
    %39 = math.exp %38 : vector<8x8xf32>
    %cst_13 = arith.constant dense<0.000000e+00> : vector<8xf32>
    %40 = vector.multi_reduction <add>, %39, %cst_13 [1] : vector<8x8xf32> to vector<8xf32>
    %41 = vector.shape_cast %40 : vector<8xf32> to vector<8x1xf32>
    %42 = tpu.reciprocal %41 {approx = true} : vector<8x1xf32> -> vector<8x1xf32>
    %43 = vector.broadcast %42 : vector<8x1xf32> to vector<8x8xf32>
    %44 = arith.mulf %39, %43 : vector<8x8xf32>
    %45 = arith.truncf %44 : vector<8x8xf32> to vector<8x8xbf16>
    %cst_14 = arith.constant dense<0.000000e+00> : vector<8x8xf32>
    %46 = tpu.matmul %45, %12, %cst_14 {dimension_numbers = #tpu.dot_dimension_numbers<[1], [0], [0], [1], [0, 0, 1, 1], [], []>} : vector<8x8xbf16>, vector<8x8xbf16>, vector<8x8xf32> -> vector<8x8xf32>
    %47 = arith.truncf %46 : vector<8x8xf32> to vector<8x8xbf16>
    %c0_15 = arith.constant 0 : index
    %c0_16 = arith.constant 0 : index
    %48 = vector.load %arg10[%c0_15, %c0_16] : memref<8x32xf32, #tpu.memory_space<vmem>>, vector<8x32xf32>
    %c0_17 = arith.constant 0 : index
    %c0_18 = arith.constant 0 : index
    %c0_19 = arith.constant 0 : index
    %49 = vector.load %arg7[%c0_17, %c0_18, %c0_19] : memref<1x8x32xbf16, #tpu.memory_space<vmem>>, vector<1x8x32xbf16>
    %50 = vector.shape_cast %49 : vector<1x8x32xbf16> to vector<8x32xbf16>
    %cst_20 = arith.constant dense<0.000000e+00> : vector<8x32xf32>
    %51 = tpu.matmul %47, %50, %cst_20 {dimension_numbers = #tpu.dot_dimension_numbers<[1], [0], [0], [1], [0, 0, 1, 1], [], []>} : vector<8x8xbf16>, vector<8x32xbf16>, vector<8x32xf32> -> vector<8x32xf32>
    %52 = arith.addf %48, %51 : vector<8x32xf32>
    %c0_21 = arith.constant 0 : index
    %c0_22 = arith.constant 0 : index
    %53 = vector.load %arg10[%c0_21, %c0_22] : memref<8x32xf32, #tpu.memory_space<vmem>>, vector<8x32xf32>
    tpu.vector_store %arg10[%c0_21, %c0_22], %52 {strides = array<i32>} : memref<8x32xf32, #tpu.memory_space<vmem>>, vector<8x32xf32>,
    %c3_i32 = arith.constant 3 : i32
    %54 = arith.cmpi eq, %arg1, %c3_i32 : i32
    %55 = arith.extui %54 : i1 to i32
    %c0_i32_23 = arith.constant 0 : i32
    %56 = arith.cmpi ne, %55, %c0_i32_23 : i32
    scf.if %56 {
      %c0_24 = arith.constant 0 : index
      %c0_25 = arith.constant 0 : index
      %c0_26 = arith.constant 0 : index
      %57 = vector.load %arg2[%c0_24, %c0_25, %c0_26] : memref<1x8x32xf32, #tpu.memory_space<vmem>>, vector<1x8x32xf32>
      %58 = vector.shape_cast %57 : vector<1x8x32xf32> to vector<8x32xf32>
      %c0_27 = arith.constant 0 : index
      %c0_28 = arith.constant 0 : index
      %59 = vector.load %arg10[%c0_27, %c0_28] : memref<8x32xf32, #tpu.memory_space<vmem>>, vector<8x32xf32>
      %60 = arith.addf %58, %59 : vector<8x32xf32>
      %c0_29 = arith.constant 0 : index
      %c0_30 = arith.constant 0 : index
      %c0_31 = arith.constant 0 : index
      %61 = vector.load %arg8[%c0_29, %c0_30, %c0_31] : memref<1x8x32xf32, #tpu.memory_space<vmem>>, vector<1x8x32xf32>
      %62 = vector.shape_cast %61 : vector<1x8x32xf32> to vector<8x32xf32>
      %63 = vector.shape_cast %60 : vector<8x32xf32> to vector<1x8x32xf32>
      tpu.vector_store %arg8[%c0_29, %c0_30, %c0_31], %63 {strides = array<i32>} : memref<1x8x32xf32, #tpu.memory_space<vmem>>, vector<1x8x32xf32>,
    } else {
    }
    return
  }
  func.func @transform_0(%arg0: i32, %arg1: i32) -> (i32, i32, i32) {
    %c0_i32 = arith.constant 0 : i32
    %c0_i32_0 = arith.constant 0 : i32
    %c0_i32_1 = arith.constant 0 : i32
    return %arg0, %c0_i32, %c0_i32_0 : i32, i32, i32
  }
  func.func @transform_1(%arg0: i32, %arg1: i32) -> (i32, i32) {
    %c0_i32 = arith.constant 0 : i32
    %c0_i32_0 = arith.constant 0 : i32
    %c0_i32_1 = arith.constant 0 : i32
    return %c0_i32, %c0_i32_0 : i32, i32
  }
  func.func @transform_2(%arg0: i32, %arg1: i32) -> (i32, i32) {
    %c0_i32 = arith.constant 0 : i32
    %c0_i32_0 = arith.constant 0 : i32
    %c0_i32_1 = arith.constant 0 : i32
    return %c0_i32, %c0_i32_0 : i32, i32
  }
  func.func @transform_3(%arg0: i32, %arg1: i32) -> (i32, i32) {
    %c0_i32 = arith.constant 0 : i32
    %c0_i32_0 = arith.constant 0 : i32
    %c0_i32_1 = arith.constant 0 : i32
    return %c0_i32, %c0_i32_0 : i32, i32
  }
  func.func @transform_4(%arg0: i32, %arg1: i32) -> (i32, i32, i32) {
    %c0_i32 = arith.constant 0 : i32
    %c0_i32_0 = arith.constant 0 : i32
    %c0_i32_1 = arith.constant 0 : i32
    return %arg1, %c0_i32, %c0_i32_0 : i32, i32, i32
  }
  func.func @transform_5(%arg0: i32, %arg1: i32) -> (i32, i32, i32) {
    %c0_i32 = arith.constant 0 : i32
    %c0_i32_0 = arith.constant 0 : i32
    %c0_i32_1 = arith.constant 0 : i32
    return %arg1, %c0_i32, %c0_i32_0 : i32, i32, i32
  }
  func.func @transform_6(%arg0: i32, %arg1: i32) -> (i32, i32, i32) {
    %c0_i32 = arith.constant 0 : i32
    %c0_i32_0 = arith.constant 0 : i32
    %c0_i32_1 = arith.constant 0 : i32
    return %arg0, %c0_i32, %c0_i32_0 : i32, i32, i32
  }
}

module attributes {stable_mosaic.version = 11 : i64} {
  func.func @_attn_kernel(%arg0: i32, %arg1: i32, %arg2: memref<1x8x32xf32, #tpu.memory_space<vmem>>, %arg3: memref<8x8xf32, #tpu.memory_space<vmem>>, %arg4: memref<8x8xf32, #tpu.memory_space<vmem>>, %arg5: memref<1x32xf32, #tpu.memory_space<vmem>>, %arg6: memref<1x32x24xbf16, #tpu.memory_space<vmem>>, %arg7: memref<1x8x32xbf16, #tpu.memory_space<vmem>>, %arg8: memref<1x8x32xf32, #tpu.memory_space<vmem>>, %arg9: memref<8x32xbf16, #tpu.memory_space<vmem>>, %arg10: memref<8x32xf32, #tpu.memory_space<vmem>>) attributes {dimension_semantics = [#tpu.dimension_semantics<parallel>, #tpu.dimension_semantics<arbitrary>], iteration_bounds = array<i64: 2, 4>, scalar_prefetch = 0 : i64, scratch_operands = 2 : i64, tpu.core_type = #tpu.core_type<tc>, window_params = [{transform_indices = @transform_0, window_bounds = array<i64: 1, 8, 32>}, {pipeline_mode = #tpu.pipeline_mode<synchronous>, transform_indices = @transform_1, window_bounds = array<i64: 8, 8>}, {pipeline_mode = #tpu.pipeline_mode<synchronous>, transform_indices = @transform_2, window_bounds = array<i64: 8, 8>}, {pipeline_mode = #tpu.pipeline_mode<synchronous>, transform_indices = @transform_3, window_bounds = array<i64: 1, 32>}, {transform_indices = @transform_4, window_bounds = array<i64: 1, 32, 24>}, {transform_indices = @transform_5, window_bounds = array<i64: 1, 8, 32>}, {transform_indices = @transform_6, window_bounds = array<i64: 1, 8, 32>}]} {
    %c0_i32 = arith.constant 0 : i32
    %0 = arith.cmpi eq, %arg1, %c0_i32 : i32
    %1 = arith.extui %0 : i1 to i32
    %c0_i32_0 = arith.constant 0 : i32
    %2 = arith.cmpi ne, %1, %c0_i32_0 : i32
    scf.if %2 {
      %c0_24 = arith.constant 0 : index
      %c0_25 = arith.constant 0 : index
      %c0_26 = arith.constant 0 : index
      %57 = vector.load %arg2[%c0_24, %c0_25, %c0_26] : memref<1x8x32xf32, #tpu.memory_space<vmem>>, vector<1x8x32xf32>
      %58 = vector.shape_cast %57 : vector<1x8x32xf32> to vector<8x32xf32>
      %59 = arith.mulf %58, %58 : vector<8x32xf32>
      %cst_27 = arith.constant dense<0.000000e+00> : vector<8xf32>
      %60 = vector.multi_reduction <add>, %59, %cst_27 [1] : vector<8x32xf32> to vector<8xf32>
      %61 = vector.shape_cast %60 : vector<8xf32> to vector<8x1xf32>
      %cst_28 = arith.constant 3.200000e+01 : f32
      %62 = vector.broadcast %cst_28 : f32 to vector<8x1xf32>
      %63 = arith.divf %61, %62 : vector<8x1xf32>
      %cst_29 = arith.constant 9.99999997E-7 : f32
      %64 = vector.broadcast %cst_29 : f32 to vector<8x1xf32>
      %65 = arith.addf %63, %64 : vector<8x1xf32>
      %66 = math.rsqrt %65 : vector<8x1xf32>
      %67 = vector.broadcast %66 : vector<8x1xf32> to vector<8x32xf32>
      %68 = arith.mulf %58, %67 : vector<8x32xf32>
      %c0_30 = arith.constant 0 : index
      %c0_31 = arith.constant 0 : index
      %69 = vector.load %arg5[%c0_30, %c0_31] : memref<1x32xf32, #tpu.memory_space<vmem>>, vector<1x32xf32>
      %70 = vector.broadcast %69 : vector<1x32xf32> to vector<8x32xf32>
      %71 = arith.mulf %68, %70 : vector<8x32xf32>
      %72 = arith.truncf %71 : vector<8x32xf32> to vector<8x32xbf16>
      %c0_32 = arith.constant 0 : index
      %c0_33 = arith.constant 0 : index
      %73 = vector.load %arg9[%c0_32, %c0_33] : memref<8x32xbf16, #tpu.memory_space<vmem>>, vector<8x32xbf16>
      tpu.vector_store %arg9[%c0_32, %c0_33], %72 {strides = array<i32>} : memref<8x32xbf16, #tpu.memory_space<vmem>>, vector<8x32xbf16>,
      %cst_34 = arith.constant 0.000000e+00 : f32
      %74 = vector.broadcast %cst_34 : f32 to vector<8x32xf32>
      %c0_35 = arith.constant 0 : index
      %c0_36 = arith.constant 0 : index
      %75 = vector.load %arg10[%c0_35, %c0_36] : memref<8x32xf32, #tpu.memory_space<vmem>>, vector<8x32xf32>
      tpu.vector_store %arg10[%c0_35, %c0_36], %74 {strides = array<i32>} : memref<8x32xf32, #tpu.memory_space<vmem>>, vector<8x32xf32>,
    } else {
    }
    %c0 = arith.constant 0 : index
    %c0_1 = arith.constant 0 : index
    %3 = vector.load %arg9[%c0, %c0_1] : memref<8x32xbf16, #tpu.memory_space<vmem>>, vector<8x32xbf16>
    %c0_2 = arith.constant 0 : index
    %c0_3 = arith.constant 0 : index
    %c0_4 = arith.constant 0 : index
    %4 = vector.load %arg6[%c0_2, %c0_3, %c0_4] : memref<1x32x24xbf16, #tpu.memory_space<vmem>>, vector<1x32x24xbf16>
    %5 = vector.shape_cast %4 : vector<1x32x24xbf16> to vector<32x24xbf16>
    %cst = arith.constant dense<0.000000e+00> : vector<8x24xf32>
    %6 = tpu.matmul %3, %5, %cst {dimension_numbers = #tpu.dot_dimension_numbers<[1], [0], [0], [1], [0, 0, 1, 1], [], []>} : vector<8x32xbf16>, vector<32x24xbf16>, vector<8x24xf32> -> vector<8x24xf32>
    %7 = vector.extract_strided_slice %6 {offsets = [0, 0], sizes = [8, 8], strides = [1, 1]} : vector<8x24xf32> to vector<8x8xf32>
    %cst_5 = arith.constant 0.353553385 : f32
    %8 = vector.broadcast %cst_5 : f32 to vector<8x8xf32>
    %9 = arith.mulf %7, %8 : vector<8x8xf32>
    %10 = vector.extract_strided_slice %6 {offsets = [0, 8], sizes = [8, 8], strides = [1, 1]} : vector<8x24xf32> to vector<8x8xf32>
    %11 = vector.extract_strided_slice %6 {offsets = [0, 16], sizes = [8, 8], strides = [1, 1]} : vector<8x24xf32> to vector<8x8xf32>
    %12 = arith.truncf %11 : vector<8x8xf32> to vector<8x8xbf16>
    %c0_6 = arith.constant 0 : index
    %c0_7 = arith.constant 0 : index
    %13 = vector.load %arg3[%c0_6, %c0_7] : memref<8x8xf32, #tpu.memory_space<vmem>>, vector<8x8xf32>
    %c0_8 = arith.constant 0 : index
    %c0_9 = arith.constant 0 : index
    %14 = vector.load %arg4[%c0_8, %c0_9] : memref<8x8xf32, #tpu.memory_space<vmem>>, vector<8x8xf32>
    %15 = vector.extract_strided_slice %9 {offsets = [0, 4], sizes = [8, 4], strides = [1, 1]} : vector<8x8xf32> to vector<8x4xf32>
    %16 = vector.extract_strided_slice %9 {offsets = [0, 0], sizes = [8, 4], strides = [1, 1]} : vector<8x8xf32> to vector<8x4xf32>
    %17 = tpu.concatenate %15, %16 in 1 : vector<8x4xf32>, vector<8x4xf32> -> vector<8x8xf32>
    %18 = vector.extract_strided_slice %10 {offsets = [0, 4], sizes = [8, 4], strides = [1, 1]} : vector<8x8xf32> to vector<8x4xf32>
    %19 = vector.extract_strided_slice %10 {offsets = [0, 0], sizes = [8, 4], strides = [1, 1]} : vector<8x8xf32> to vector<8x4xf32>
    %20 = tpu.concatenate %18, %19 in 1 : vector<8x4xf32>, vector<8x4xf32> -> vector<8x8xf32>
    %21 = arith.mulf %9, %13 : vector<8x8xf32>
    %22 = arith.mulf %17, %14 : vector<8x8xf32>
    %23 = arith.addf %21, %22 : vector<8x8xf32>
    %24 = arith.truncf %23 : vector<8x8xf32> to vector<8x8xbf16>
    %25 = arith.mulf %10, %13 : vector<8x8xf32>
    %26 = arith.mulf %20, %14 : vector<8x8xf32>
    %27 = arith.addf %25, %26 : vector<8x8xf32>
    %28 = arith.truncf %27 : vector<8x8xf32> to vector<8x8xbf16>
    %cst_10 = arith.constant dense<0.000000e+00> : vector<8x8xf32>
    %29 = tpu.matmul %24, %28, %cst_10 {dimension_numbers = #tpu.dot_dimension_numbers<[1], [1], [0], [0], [0, 0, 1, 0], [], []>} : vector<8x8xbf16>, vector<8x8xbf16>, vector<8x8xf32> -> vector<8x8xf32>
    %30 = tpu.iota {dimensions = array<i32: 0>} : vector<8x8xi32>
    %31 = tpu.iota {dimensions = array<i32: 1>} : vector<8x8xi32>
    %32 = arith.cmpi sle, %31, %30 : vector<8x8xi32>
    %cst_11 = arith.constant -1.000000e+30 : f32
    %33 = vector.broadcast %cst_11 : f32 to vector<8x8xf32>
    %34 = arith.select %32, %29, %33 : vector<8x8xi1>, vector<8x8xf32>
    %cst_12 = arith.constant dense<0xFF800000> : vector<8xf32>
    %35 = vector.multi_reduction <maximumf>, %34, %cst_12 [1] : vector<8x8xf32> to vector<8xf32>
    %36 = vector.shape_cast %35 : vector<8xf32> to vector<8x1xf32>
    %37 = vector.broadcast %36 : vector<8x1xf32> to vector<8x8xf32>
    %38 = arith.subf %34, %37 : vector<8x8xf32>
    %39 = math.exp %38 : vector<8x8xf32>
    %cst_13 = arith.constant dense<0.000000e+00> : vector<8xf32>
    %40 = vector.multi_reduction <add>, %39, %cst_13 [1] : vector<8x8xf32> to vector<8xf32>
    %41 = vector.shape_cast %40 : vector<8xf32> to vector<8x1xf32>
    %42 = tpu.reciprocal %41 {approx = true} : vector<8x1xf32> -> vector<8x1xf32>
    %43 = vector.broadcast %42 : vector<8x1xf32> to vector<8x8xf32>
    %44 = arith.mulf %39, %43 : vector<8x8xf32>
    %45 = arith.truncf %44 : vector<8x8xf32> to vector<8x8xbf16>
    %cst_14 = arith.constant dense<0.000000e+00> : vector<8x8xf32>
    %46 = tpu.matmul %45, %12, %cst_14 {dimension_numbers = #tpu.dot_dimension_numbers<[1], [0], [0], [1], [0, 0, 1, 1], [], []>} : vector<8x8xbf16>, vector<8x8xbf16>, vector<8x8xf32> -> vector<8x8xf32>
    %47 = arith.truncf %46 : vector<8x8xf32> to vector<8x8xbf16>
    %c0_15 = arith.constant 0 : index
    %c0_16 = arith.constant 0 : index
    %48 = vector.load %arg10[%c0_15, %c0_16] : memref<8x32xf32, #tpu.memory_space<vmem>>, vector<8x32xf32>
    %c0_17 = arith.constant 0 : index
    %c0_18 = arith.constant 0 : index
    %c0_19 = arith.constant 0 : index
    %49 = vector.load %arg7[%c0_17, %c0_18, %c0_19] : memref<1x8x32xbf16, #tpu.memory_space<vmem>>, vector<1x8x32xbf16>
    %50 = vector.shape_cast %49 : vector<1x8x32xbf16> to vector<8x32xbf16>
    %cst_20 = arith.constant dense<0.000000e+00> : vector<8x32xf32>
    %51 = tpu.matmul %47, %50, %cst_20 {dimension_numbers = #tpu.dot_dimension_numbers<[1], [0], [0], [1], [0, 0, 1, 1], [], []>} : vector<8x8xbf16>, vector<8x32xbf16>, vector<8x32xf32> -> vector<8x32xf32>
    %52 = arith.addf %48, %51 : vector<8x32xf32>
    %c0_21 = arith.constant 0 : index
    %c0_22 = arith.constant 0 : index
    %53 = vector.load %arg10[%c0_21, %c0_22] : memref<8x32xf32, #tpu.memory_space<vmem>>, vector<8x32xf32>
    tpu.vector_store %arg10[%c0_21, %c0_22], %52 {strides = array<i32>} : memref<8x32xf32, #tpu.memory_space<vmem>>, vector<8x32xf32>,
    %c3_i32 = arith.constant 3 : i32
    %54 = arith.cmpi eq, %arg1, %c3_i32 : i32
    %55 = arith.extui %54 : i1 to i32
    %c0_i32_23 = arith.constant 0 : i32
    %56 = arith.cmpi ne, %55, %c0_i32_23 : i32
    scf.if %56 {
      %c0_24 = arith.constant 0 : index
      %c0_25 = arith.constant 0 : index
      %c0_26 = arith.constant 0 : index
      %57 = vector.load %arg2[%c0_24, %c0_25, %c0_26] : memref<1x8x32xf32, #tpu.memory_space<vmem>>, vector<1x8x32xf32>
      %58 = vector.shape_cast %57 : vector<1x8x32xf32> to vector<8x32xf32>
      %c0_27 = arith.constant 0 : index
      %c0_28 = arith.constant 0 : index
      %59 = vector.load %arg10[%c0_27, %c0_28] : memref<8x32xf32, #tpu.memory_space<vmem>>, vector<8x32xf32>
      %60 = arith.addf %58, %59 : vector<8x32xf32>
      %c0_29 = arith.constant 0 : index
      %c0_30 = arith.constant 0 : index
      %c0_31 = arith.constant 0 : index
      %61 = vector.load %arg8[%c0_29, %c0_30, %c0_31] : memref<1x8x32xf32, #tpu.memory_space<vmem>>, vector<1x8x32xf32>
      %62 = vector.shape_cast %61 : vector<1x8x32xf32> to vector<8x32xf32>
      %63 = vector.shape_cast %60 : vector<8x32xf32> to vector<1x8x32xf32>
      tpu.vector_store %arg8[%c0_29, %c0_30, %c0_31], %63 {strides = array<i32>} : memref<1x8x32xf32, #tpu.memory_space<vmem>>, vector<1x8x32xf32>,
    } else {
    }
    return
  }
  func.func @transform_0(%arg0: i32, %arg1: i32) -> (i32, i32, i32) {
    %c0_i32 = arith.constant 0 : i32
    %c0_i32_0 = arith.constant 0 : i32
    %c0_i32_1 = arith.constant 0 : i32
    return %arg0, %c0_i32, %c0_i32_0 : i32, i32, i32
  }
  func.func @transform_1(%arg0: i32, %arg1: i32) -> (i32, i32) {
    %c0_i32 = arith.constant 0 : i32
    %c0_i32_0 = arith.constant 0 : i32
    %c0_i32_1 = arith.constant 0 : i32
    return %c0_i32, %c0_i32_0 : i32, i32
  }
  func.func @transform_2(%arg0: i32, %arg1: i32) -> (i32, i32) {
    %c0_i32 = arith.constant 0 : i32
    %c0_i32_0 = arith.constant 0 : i32
    %c0_i32_1 = arith.constant 0 : i32
    return %c0_i32, %c0_i32_0 : i32, i32
  }
  func.func @transform_3(%arg0: i32, %arg1: i32) -> (i32, i32) {
    %c0_i32 = arith.constant 0 : i32
    %c0_i32_0 = arith.constant 0 : i32
    %c0_i32_1 = arith.constant 0 : i32
    return %c0_i32, %c0_i32_0 : i32, i32
  }
  func.func @transform_4(%arg0: i32, %arg1: i32) -> (i32, i32, i32) {
    %c0_i32 = arith.constant 0 : i32
    %c0_i32_0 = arith.constant 0 : i32
    %c0_i32_1 = arith.constant 0 : i32
    return %arg1, %c0_i32, %c0_i32_0 : i32, i32, i32
  }
  func.func @transform_5(%arg0: i32, %arg1: i32) -> (i32, i32, i32) {
    %c0_i32 = arith.constant 0 : i32
    %c0_i32_0 = arith.constant 0 : i32
    %c0_i32_1 = arith.constant 0 : i32
    return %arg1, %c0_i32, %c0_i32_0 : i32, i32, i32
  }
  func.func @transform_6(%arg0: i32, %arg1: i32) -> (i32, i32, i32) {
    %c0_i32 = arith.constant 0 : i32
    %c0_i32_0 = arith.constant 0 : i32
    %c0_i32_1 = arith.constant 0 : i32
    return %arg0, %c0_i32, %c0_i32_0 : i32, i32, i32
  }
}

</mosaic_0001>

<llo_original>
// kernel: tpu_custom_call.1
$region0: #{tpu_custom_call.1}
  #allocation0 [shape = 'u32[]', space=smem, size = 0x4, offset = 0x4, fixed_abs, tag = 'smem constant byte address 0x4 - core index']
  #allocation1 [shape = 'u32[144,128]{1,0:T(1,128)}', space=vmem, size = 0x12000, scoped, tag = 'internal scratch']
  #allocation2 [shape = 'bf16[8,32]{1,0:T(8,128)(2,1)}', space=vmem, size = 0x800, scoped, tag = 'scratch operand']
  #allocation3 [shape = 'f32[8,32]{1,0:T(8,128)}', space=vmem, size = 0x1000, scoped, tag = 'scratch operand']
  %s0 = inlined_call_operand.vmem [shape: f32[2,8,32], index: 0, kind: input, shape index: {}]
  %s1 = inlined_call_operand.vmem [shape: f32[8,8], index: 1, kind: input, shape index: {}]
  %s2 = inlined_call_operand.vmem [shape: f32[8,8], index: 2, kind: input, shape index: {}]
  %s3 = inlined_call_operand.vmem [shape: f32[1,32], index: 3, kind: input, shape index: {}]
  %s4 = inlined_call_operand.vmem [shape: bf16[4,32,24], index: 4, kind: input, shape index: {}]
  %s5 = inlined_call_operand.vmem [shape: bf16[4,8,32], index: 5, kind: input, shape index: {}]
  %s6 = inlined_call_operand.hbm [shape: f32[2,8,32], index: 6, kind: output, shape index: {}]
  %s7 = sld [smem:[#allocation0]]
  $region65: #{tpu_custom_call.1} parent=0
    _
  %s9 = ssub.s32 1, %s7
  %s10 = scalar_select 0, %s9, %s7
  $region1: #{tpu_custom_call.1} parent=0
    #allocation4 [shape = 'u8[8192]{0}', space=vmem, size = 0x2000, scoped, tag = 'output window, operand 0']
    #allocation5 [shape = 's32[2]{0}', space=sflag, size = 0x8, scoped, tag = 'scoped memory for tpu_custom_call.1']
    %11 = vsyncpa [#allocation5], 0
    %s12 = scalar_lea.sflag [#allocation5], 1
    %13 = vsyncpa %s12, 0
    loop: start=0, step=1, limit=10
    $region2: #{tpu_custom_call.1} parent=1 // loop_pre_header
      _
    $region3: #{tpu_custom_call.1} parent=1 // loop_header
      %s15 = sphi 0, %s19
      %p16 = scmp.ge.s32.totalorder %s15, 10
      %s22 = sphi 0, %s34
      %s23 = sphi 0, %s30
      %s24 = sphi 0, %s22
      %s25 = sphi 0, %s23
      %s26 = sphi 0, %s24
      %s27 = sphi 0, %s25
      %s37 = sphi 0, %s39
      %s40 = sphi 0, %s37
      %s41 = sphi 0, %s40
      %s57 = sphi 0, %s41
      %s61 = sphi 0, %s61
      %s63 = sphi 0, %s61
      %s64 = sphi 0, %s63
      %s78 = sphi 0, %s64
      %s82 = sphi 0, %s82
      %s84 = sphi 0, %s82
      %s85 = sphi 0, %s84
      %s99 = sphi 0, %s85
      %s103 = sphi 0, %s103
      %s105 = sphi 0, %s103
      %s106 = sphi 0, %s105
      %s120 = sphi 0, %s106
      %s126 = sphi 0, %s128
      %s129 = sphi 0, %s126
      %s130 = sphi 0, %s129
      %s146 = sphi 0, %s130
      %s152 = sphi 0, %s154
      %s155 = sphi 0, %s152
      %s156 = sphi 0, %s155
      %s172 = sphi 0, %s156
      %s178 = sphi 0, %s180
      %s181 = sphi 0, %s178
      %s182 = sphi 0, %s181
      %s198 = sphi 0, %s182
    $region4: #{tpu_custom_call.1} parent=1 // loop_header_branch
      %18 = sbr.rel (%p16) target = $region8
    $region5: #{tpu_custom_call.1} parent=1 // loop_body
      %s20 = ssub.s32 %s15, 1
      %s21 = ssub.s32 %s15, 2
      %s28 = sadd.s32 1, %s23
      %p29 = scmp.ge.s32.totalorder %s28, 4
      %s30 = scalar_select %p29, 0, %s28
      %s31 = sadd.s32 1, %s22
      %s32 = scalar_select %p29, %s31, %s22
      %p33 = scmp.ge.s32.totalorder %s32, 2
      %s34 = scalar_select %p33, 0, %s32
      %s35 = ssub.s32 %s22, %s34
      %p36 = scmp.eq.s32.totalorder %s35, 0
      %s38 = sadd.s32 %s37, 1
      %s39 = scalar_select %p36, %s37, %s38
      %p42 = pneg %p36
      %p43 = scmp.eq.s32.totalorder %s15, 7
      %p44 = por %p42, %p43
      %p45 = scmp.ne.s32.totalorder %s37, %s40
      %p46 = scmp.eq.s32.totalorder %s15, 0
      %p47 = por %p45, %p46
      %p48 = scmp.ne.s32.totalorder %s37, %s40
      %p49 = scmp.eq.s32.totalorder %s20, 7
      %p50 = por %p48, %p49
      %p51 = scmp.ne.s32.totalorder %s40, %s41
      %p52 = scmp.eq.s32.totalorder %s20, 0
      %p53 = por %p51, %p52
      %p54 = scmp.ne.s32.totalorder %s40, %s41
      %p55 = scmp.eq.s32.totalorder %s21, 7
      %p56 = por %p54, %p55
      %p58 = scmp.ne.s32.totalorder %s41, %s57
      %p59 = scmp.eq.s32.totalorder %s21, 0
      %p60 = por %p58, %p59
      %s62 = sadd.s32 %s61, 1
      %p65 = scmp.eq.s32.totalorder %s15, 7
      %p66 = scmp.ne.s32.totalorder %s61, %s63
      %p67 = scmp.eq.s32.totalorder %s15, 0
      %p68 = por %p66, %p67
      %p69 = scmp.ne.s32.totalorder %s61, %s63
      %p70 = scmp.eq.s32.totalorder %s20, 7
      %p71 = por %p69, %p70
      %p72 = scmp.ne.s32.totalorder %s63, %s64
      %p73 = scmp.eq.s32.totalorder %s20, 0
      %p74 = por %p72, %p73
      %p75 = scmp.ne.s32.totalorder %s63, %s64
      %p76 = scmp.eq.s32.totalorder %s21, 7
      %p77 = por %p75, %p76
      %p79 = scmp.ne.s32.totalorder %s64, %s78
      %p80 = scmp.eq.s32.totalorder %s21, 0
      %p81 = por %p79, %p80
      %s83 = sadd.s32 %s82, 1
      %p86 = scmp.eq.s32.totalorder %s15, 7
      %p87 = scmp.ne.s32.totalorder %s82, %s84
      %p88 = scmp.eq.s32.totalorder %s15, 0
      %p89 = por %p87, %p88
      %p90 = scmp.ne.s32.totalorder %s82, %s84
      %p91 = scmp.eq.s32.totalorder %s20, 7
      %p92 = por %p90, %p91
      %p93 = scmp.ne.s32.totalorder %s84, %s85
      %p94 = scmp.eq.s32.totalorder %s20, 0
      %p95 = por %p93, %p94
      %p96 = scmp.ne.s32.totalorder %s84, %s85
      %p97 = scmp.eq.s32.totalorder %s21, 7
      %p98 = por %p96, %p97
      %p100 = scmp.ne.s32.totalorder %s85, %s99
      %p101 = scmp.eq.s32.totalorder %s21, 0
      %p102 = por %p100, %p101
      %s104 = sadd.s32 %s103, 1
      %p107 = scmp.eq.s32.totalorder %s15, 7
      %p108 = scmp.ne.s32.totalorder %s103, %s105
      %p109 = scmp.eq.s32.totalorder %s15, 0
      %p110 = por %p108, %p109
      %p111 = scmp.ne.s32.totalorder %s103, %s105
      %p112 = scmp.eq.s32.totalorder %s20, 7
      %p113 = por %p111, %p112
      %p114 = scmp.ne.s32.totalorder %s105, %s106
      %p115 = scmp.eq.s32.totalorder %s20, 0
      %p116 = por %p114, %p115
      %p117 = scmp.ne.s32.totalorder %s105, %s106
      %p118 = scmp.eq.s32.totalorder %s21, 7
      %p119 = por %p117, %p118
      %p121 = scmp.ne.s32.totalorder %s106, %s120
      %p122 = scmp.eq.s32.totalorder %s21, 0
      %p123 = por %p121, %p122
      %s124 = ssub.s32 %s23, %s30
      %p125 = scmp.eq.s32.totalorder %s124, 0
      %s127 = sadd.s32 %s126, 1
      %s128 = scalar_select %p125, %s126, %s127
      %p131 = pneg %p125
      %p132 = scmp.eq.s32.totalorder %s15, 7
      %p133 = por %p131, %p132
      %p134 = scmp.ne.s32.totalorder %s126, %s129
      %p135 = scmp.eq.s32.totalorder %s15, 0
      %p136 = por %p134, %p135
      %p137 = scmp.ne.s32.totalorder %s126, %s129
      %p138 = scmp.eq.s32.totalorder %s20, 7
      %p139 = por %p137, %p138
      %p140 = scmp.ne.s32.totalorder %s129, %s130
      %p141 = scmp.eq.s32.totalorder %s20, 0
      %p142 = por %p140, %p141
      %p143 = scmp.ne.s32.totalorder %s129, %s130
      %p144 = scmp.eq.s32.totalorder %s21, 7
      %p145 = por %p143, %p144
      %p147 = scmp.ne.s32.totalorder %s130, %s146
      %p148 = scmp.eq.s32.totalorder %s21, 0
      %p149 = por %p147, %p148
      %s150 = ssub.s32 %s23, %s30
      %p151 = scmp.eq.s32.totalorder %s150, 0
      %s153 = sadd.s32 %s152, 1
      %s154 = scalar_select %p151, %s152, %s153
      %p157 = pneg %p151
      %p158 = scmp.eq.s32.totalorder %s15, 7
      %p159 = por %p157, %p158
      %p160 = scmp.ne.s32.totalorder %s152, %s155
      %p161 = scmp.eq.s32.totalorder %s15, 0
      %p162 = por %p160, %p161
      %p163 = scmp.ne.s32.totalorder %s152, %s155
      %p164 = scmp.eq.s32.totalorder %s20, 7
      %p165 = por %p163, %p164
      %p166 = scmp.ne.s32.totalorder %s155, %s156
      %p167 = scmp.eq.s32.totalorder %s20, 0
      %p168 = por %p166, %p167
      %p169 = scmp.ne.s32.totalorder %s155, %s156
      %p170 = scmp.eq.s32.totalorder %s21, 7
      %p171 = por %p169, %p170
      %p173 = scmp.ne.s32.totalorder %s156, %s172
      %p174 = scmp.eq.s32.totalorder %s21, 0
      %p175 = por %p173, %p174
      %s176 = ssub.s32 %s22, %s34
      %p177 = scmp.eq.s32.totalorder %s176, 0
      %s179 = sadd.s32 %s178, 1
      %s180 = scalar_select %p177, %s178, %s179
      %p183 = pneg %p177
      %p184 = scmp.eq.s32.totalorder %s15, 7
      %p185 = por %p183, %p184
      %p186 = scmp.ne.s32.totalorder %s178, %s181
      %p187 = scmp.eq.s32.totalorder %s15, 0
      %p188 = por %p186, %p187
      %p189 = scmp.ne.s32.totalorder %s178, %s181
      %p190 = scmp.eq.s32.totalorder %s20, 7
      %p191 = por %p189, %p190
      %p192 = scmp.ne.s32.totalorder %s181, %s182
      %p193 = scmp.eq.s32.totalorder %s20, 0
      %p194 = por %p192, %p193
      %p195 = scmp.ne.s32.totalorder %s181, %s182
      %p196 = scmp.eq.s32.totalorder %s21, 7
      %p197 = por %p195, %p196
      %p199 = scmp.ne.s32.totalorder %s182, %s198
      %p200 = scmp.eq.s32.totalorder %s21, 0
      %p201 = por %p199, %p200
      %p202 = scmp.le.s32.totalorder 1, %s15
      %p203 = scmp.lt.s32.totalorder %s15, 9
      %p204 = pnand %p202, %p203
      %p205 = pneg %p204
      // Predicated region
      $region9: #{tpu_custom_call.1} parent=5 // pred_check
        _
      $region10: #{tpu_custom_call.1} parent=5 // pred_check_branch
        %207 = sbr.rel (%p204) target = $region12
      $region11: #{tpu_custom_call.1} parent=5 // pred_region
        %s208 = ssub.s32 %s15, 1
        // Predicated region
        $region13: #{tpu_custom_call.1} parent=11 // pred_check
          %p209 = pneg %p74
        $region14: #{tpu_custom_call.1} parent=11 // pred_check_branch
          %211 = sbr.rel (%p209) target = $region16
        $region15: #{tpu_custom_call.1} parent=11 // pred_region
          _
        $region16: #{tpu_custom_call.1} parent=11 // pred_fallthru
          _
        // Predicated region
        $region17: #{tpu_custom_call.1} parent=11 // pred_check
          %p212 = pneg %p95
        $region18: #{tpu_custom_call.1} parent=11 // pred_check_branch
          %214 = sbr.rel (%p212) target = $region20
        $region19: #{tpu_custom_call.1} parent=11 // pred_region
          _
        $region20: #{tpu_custom_call.1} parent=11 // pred_fallthru
          _
        // Predicated region
        $region21: #{tpu_custom_call.1} parent=11 // pred_check
          %p215 = pneg %p116
        $region22: #{tpu_custom_call.1} parent=11 // pred_check_branch
          %217 = sbr.rel (%p215) target = $region24
        $region23: #{tpu_custom_call.1} parent=11 // pred_region
          _
        $region24: #{tpu_custom_call.1} parent=11 // pred_fallthru
          _
      $region12: #{tpu_custom_call.1} parent=5 // pred_fallthru
        _
      %p218 = scmp.lt.s32.totalorder %s15, 8
      // Predicated region
      $region25: #{tpu_custom_call.1} parent=5 // pred_check
        %p219 = pneg %p218
      $region26: #{tpu_custom_call.1} parent=5 // pred_check_branch
        %221 = sbr.rel (%p219) target = $region28
      $region27: #{tpu_custom_call.1} parent=5 // pred_region
        // Predicated region
        $region29: #{tpu_custom_call.1} parent=27 // pred_check
          %p222 = pneg %p47
        $region30: #{tpu_custom_call.1} parent=27 // pred_check_branch
          %224 = sbr.rel (%p222) target = $region32
        $region31: #{tpu_custom_call.1} parent=27 // pred_region
          %p225 = scmp.lt.s32.totalorder %s22, 1
          %s226 = scalar_select %p225, %s22, 1
          %s227 = smul.addr %s226, 8
          %s228 = scalar_lea.vmem %s0, %s227
        $region32: #{tpu_custom_call.1} parent=27 // pred_fallthru
          _
        // Predicated region
        $region33: #{tpu_custom_call.1} parent=27 // pred_check
          %p229 = pneg %p136
        $region34: #{tpu_custom_call.1} parent=27 // pred_check_branch
          %231 = sbr.rel (%p229) target = $region36
        $region35: #{tpu_custom_call.1} parent=27 // pred_region
          %p232 = scmp.lt.s32.totalorder %s23, 3
          %s233 = scalar_select %p232, %s23, 3
          %s234 = smul.addr %s233, 4
          %s235 = smul.addr %s234, 4
          %s236 = scalar_lea.vmem %s4, %s235
        $region36: #{tpu_custom_call.1} parent=27 // pred_fallthru
          _
        // Predicated region
        $region37: #{tpu_custom_call.1} parent=27 // pred_check
          %p237 = pneg %p162
        $region38: #{tpu_custom_call.1} parent=27 // pred_check_branch
          %239 = sbr.rel (%p237) target = $region40
        $region39: #{tpu_custom_call.1} parent=27 // pred_region
          %p240 = scmp.lt.s32.totalorder %s23, 3
          %s241 = scalar_select %p240, %s23, 3
          %s242 = smul.addr %s241, 4
          %s243 = scalar_lea.vmem %s5, %s242
        $region40: #{tpu_custom_call.1} parent=27 // pred_fallthru
          _
      $region28: #{tpu_custom_call.1} parent=5 // pred_fallthru
        _
      %p244 = scmp.le.s32.totalorder 1, %s15
      %p245 = scmp.lt.s32.totalorder %s15, 9
      %p246 = pnand %p244, %p245
      %p247 = pneg %p246
      // Predicated region
      $region41: #{tpu_custom_call.1} parent=5 // pred_check
        _
      $region42: #{tpu_custom_call.1} parent=5 // pred_check_branch
        %249 = sbr.rel (%p246) target = $region44
      $region43: #{tpu_custom_call.1} parent=5 // pred_region
        %s250 = ssub.s32 %s15, 1
        %p251 = scmp.lt.s32.totalorder %s24, 1
        %s252 = scalar_select %p251, %s24, 1
        %s253 = smul.addr %s252, 8
        %s254 = scalar_lea.vmem %s0, %s253
        %p255 = pneg %p53
        %p256 = pneg %p50
        %p257 = pneg %p74
        %p258 = pneg %p71
        %p259 = pneg %p95
        %p260 = pneg %p92
        %p261 = pneg %p116
        %p262 = pneg %p113
        %p263 = scmp.lt.s32.totalorder %s25, 3
        %s264 = scalar_select %p263, %s25, 3
        %s265 = smul.addr %s264, 4
        %s266 = smul.addr %s265, 4
        %s267 = scalar_lea.vmem %s4, %s266
        %p268 = pneg %p142
        %p269 = pneg %p139
        %p270 = scmp.lt.s32.totalorder %s25, 3
        %s271 = scalar_select %p270, %s25, 3
        %s272 = smul.addr %s271, 4
        %s273 = scalar_lea.vmem %s5, %s272
        %p274 = pneg %p168
        %p275 = pneg %p165
        %p276 = pneg %p194
        %p277 = pneg %p191
        %s278 = sand.u32 %s181, 1
        %s279 = scalar_lea.sflag [#allocation5], %s278
        %s280 = sand.u32 %s181, 1
        %s281 = smul.addr %s280, 8
        %s282 = scalar_lea.vmem [#allocation4], %s281
        %p283 = scmp.lt.s32.totalorder %s24, 1
        %s284 = scalar_select %p283, %s24, 1
        %s285 = smul.addr %s284, 8
        %s286 = scalar_lea.vmem %s0, %s285
        %p287 = scmp.lt.s32.totalorder %s25, 3
        %s288 = scalar_select %p287, %s25, 3
        %s289 = smul.addr %s288, 4
        %s290 = smul.addr %s289, 4
        %s291 = scalar_lea.vmem %s4, %s290
        %p292 = scmp.lt.s32.totalorder %s25, 3
        %s293 = scalar_select %p292, %s25, 3
        %s294 = smul.addr %s293, 4
        %s295 = scalar_lea.vmem %s5, %s294
        %p297 = scmp.eq.s32.totalorder %s25, 0
        // Predicated region
        $region45: #{tpu_custom_call.1} parent=43 // pred_check
          %p298 = pneg %p297
        $region46: #{tpu_custom_call.1} parent=43 // pred_check_branch
          %300 = sbr.rel (%p298) target = $region48
        $region47: #{tpu_custom_call.1} parent=43 // pred_region
          %v301 = vld [vmem:[%s286] sm:$0xff]
          %v302 = vmul.f32 %v301, %v301
          %vm303 = vcmask 261120
          %v304 = vsel %vm303, %v302, 0.0
          %305 = vadd.xlane.f32.xlu0 %v304
          %v306 = vpop.xlane.xlu0 %305
          %v307 = vrcp.pop 32.0
          %v308 = vmul.f32 %v306, %v307
          %v309 = vadd.f32 %v308, 1e-06
          %v310 = vrsqrt.pop %v309
          %v311 = vmul.f32 %v301, %v310
          %v312 = vld [vmem:[%s3] sm:$0x1]
          %v314 = vlaneseq
          %v315 = vshrl.u32 %v314, 7
          %v316 = vsub.s32 0, %v315
          %v317 = vrot.slane %v312, %v316
          %v319 = vmul.f32 %v311, %v317
          %v320 = vpack.c.bf16 %v319, %v319
          %vm321 = vcmask 257024
          %322 = vst.msk [vmem:[#allocation2] sm:$0xf] %vm321, %v320
          %323 = vst.msk [vmem:[#allocation3] sm:$0xff] %vm303, 0.0
        $region48: #{tpu_custom_call.1} parent=43 // pred_fallthru
          _
        %v324 = vld [vmem:[#allocation2] sm:$0xf]
        %v325 = vld [vmem:[%s291] sm:$0xf]
        %v326 = vld [vmem:[%s291 + $0x4] sm:$0xf]
        %v327 = vld [vmem:[%s291 + $0x8] sm:$0xf]
        %v328 = vld [vmem:[%s291 + $0xc] sm:$0xf]
        %v333 = vunpack.c.l.b16 %v325
        %v334 = vunpack.c.l.b16 %v326
        %v335 = vunpack.c.l.b16 %v327
        %v336 = vunpack.c.l.b16 %v328
        %v337 = vpack.c.b16 %v334, %v333
        %v338 = vpack.c.b16 %v336, %v335
        %vm341 = vcmask 261120
        %v343 = vsel %vm341, %v324, 0
        %345 = vmatprep.subr.bf16.mxu0 0
        %346 = vmatpush1.bf16.msra.mxu0 %v337
        %347 = vmatprep.subr.bf16.mxu0 0
        %348 = vmatpush1.bf16.msra.mxu0 %v338
        %349 = vmatprep.subr.bf16.mxu0 0
        %350 = vmatpush1.bf16.msra.mxu0 0
        %351 = vmatprep.subr.bf16.mxu0 0
        %352 = vmatpush1.bf16.msra.mxu0 0
        %353 = vmatprep.subr.bf16.mxu0 0
        %354 = vmatpush1.bf16.msra.mxu0 0
        %355 = vmatprep.subr.bf16.mxu0 0
        %356 = vmatpush1.bf16.msra.mxu0 0
        %357 = vmatprep.subr.bf16.mxu0 0
        %358 = vmatpush1.bf16.msra.mxu0 0
        %359 = vmatprep.subr.bf16.mxu0 0
        %360 = vmatpush1.bf16.msra.mxu0 0
        %361 = vmatprep.subr.bf16.mxu0 0
        %362 = vmatpush1.bf16.msra.mxu0 0
        %363 = vmatprep.subr.bf16.mxu0 0
        %364 = vmatpush1.bf16.msra.mxu0 0
        %365 = vmatprep.subr.bf16.mxu0 0
        %366 = vmatpush1.bf16.msra.mxu0 0
        %367 = vmatprep.subr.bf16.mxu0 0
        %368 = vmatpush1.bf16.msra.mxu0 0
        %369 = vmatprep.subr.bf16.mxu0 0
        %370 = vmatpush1.bf16.msra.mxu0 0
        %371 = vmatprep.subr.bf16.mxu0 0
        %372 = vmatpush1.bf16.msra.mxu0 0
        %373 = vmatprep.subr.bf16.mxu0 0
        %374 = vmatpush1.bf16.msra.mxu0 0
        %375 = vmatprep.subr.bf16.mxu0 0
        %376 = vmatpush1.bf16.msra.mxu0 0
        %377 = vmatprep.mubr.bf16.mxu0 0
        %378 = vmatmul.mubr.bf16.gmra.mrb[0].mxu0 %v343
        %v379 = vpop.f32.mrb[0].mxu0
        %v380 = vadd.f32 0.0, %v379
        %v381 = vpop.f32.mrb[0].mxu0
        %v382 = vpop.f32.mrb[0].mxu0
        %v383 = vpop.f32.mrb[0].mxu0
        %384 = vdwg.mxu0
        %v385 = vmul.f32 %v380, 0.35355338
        %v386 = vpack.c.bf16 %v380, %v380
        %v387 = vld [vmem:[%s1] sm:$0xff]
        %v388 = vld [vmem:[%s2] sm:$0xff]
        %390 = vrot.lane.b32.xlu0 %v385, 124
        %v391 = vpop.permute.xlu0 %390
        %393 = vrot.lane.b32.xlu0 %v385, 4
        %v394 = vpop.permute.xlu0 %393
        %vm396 = vcmask 31744
        %v397 = vsel %vm396, %v391, %v394
        %399 = vrot.lane.b32.xlu0 %v380, 116
        %v400 = vpop.permute.xlu0 %399
        %402 = vrot.lane.b32.xlu0 %v380, 124
        %v403 = vpop.permute.xlu0 %402
        %v405 = vsel %vm396, %v400, %v403
        %v406 = vmul.f32 %v385, %v387
        %v407 = vmul.f32 %v397, %v388
        %v408 = vadd.f32 %v406, %v407
        %v409 = vpack.c.bf16 %v408, %v408
        %411 = vrot.lane.b32.xlu0 %v387, 8
        %v412 = vpop.permute.xlu0 %411
        %v414 = vmul.f32 %v380, %v412
        %v415 = vmul.f32 %v405, %v388
        %417 = vrot.lane.b32.xlu0 %v415, 8
        %v418 = vpop.permute.xlu0 %417
        %v420 = vadd.f32 %v414, %v418
        %v421 = vpack.c.bf16 %v420, %v420
        %423 = vrot.lane.b32.xlu0 %v421, 120
        %v424 = vpop.permute.xlu0 %423
        %vm425 = vcmask 64512
        %v427 = vsel %vm425, %v409, 0
        %v430 = vsel %vm425, %v424, 0
        %432 = vmatprep.subr.bf16.mxu0 0
        %433 = vmatpush1.bf16.xpose.msra.mxu0 %v430
        %434 = vmatprep.subr.bf16.mxu0 0
        %435 = vmatpush1.bf16.xpose.msra.mxu0 0
        %436 = vmatprep.subr.bf16.mxu0 0
        %437 = vmatpush1.bf16.xpose.msra.mxu0 0
        %438 = vmatprep.subr.bf16.mxu0 0
        %439 = vmatpush1.bf16.xpose.msra.mxu0 0
        %440 = vmatprep.subr.bf16.mxu0 0
        %441 = vmatpush1.bf16.xpose.msra.mxu0 0
        %442 = vmatprep.subr.bf16.mxu0 0
        %443 = vmatpush1.bf16.xpose.msra.mxu0 0
        %444 = vmatprep.subr.bf16.mxu0 0
        %445 = vmatpush1.bf16.xpose.msra.mxu0 0
        %446 = vmatprep.subr.bf16.mxu0 0
        %447 = vmatpush1.bf16.xpose.msra.mxu0 0
        %448 = vmatprep.subr.bf16.mxu0 0
        %449 = vmatpush1.bf16.xpose.msra.mxu0 0
        %450 = vmatprep.subr.bf16.mxu0 0
        %451 = vmatpush1.bf16.xpose.msra.mxu0 0
        %452 = vmatprep.subr.bf16.mxu0 0
        %453 = vmatpush1.bf16.xpose.msra.mxu0 0
        %454 = vmatprep.subr.bf16.mxu0 0
        %455 = vmatpush1.bf16.xpose.msra.mxu0 0
        %456 = vmatprep.subr.bf16.mxu0 0
        %457 = vmatpush1.bf16.xpose.msra.mxu0 0
        %458 = vmatprep.subr.bf16.mxu0 0
        %459 = vmatpush1.bf16.xpose.msra.mxu0 0
        %460 = vmatprep.subr.bf16.mxu0 0
        %461 = vmatpush1.bf16.xpose.msra.mxu0 0
        %462 = vmatprep.subr.bf16.mxu0 0
        %463 = vmatpush1.bf16.xpose.msra.mxu0 0
        %464 = vmatprep.mubr.bf16.mxu0 0
        %465 = vmatmul.mubr.bf16.gmra.mrb[0].mxu0 %v427
        %v466 = vpop.f32.mrb[0].mxu0
        %v467 = vadd.f32 0.0, %v466
        %v468 = vpop.f32.mrb[0].mxu0
        %v469 = vpop.f32.mrb[0].mxu0
        %v470 = vpop.f32.mrb[0].mxu0
        %471 = vdwg.mxu0
        %v472 = vlaneseq
        %v473 = vshrl.u32 %v472, 7
        %v474 = vlaneseq
        %v475 = vand.u32 %v474, 127
        %vm476 = vcmp.le.s32.totalorder %v475, %v473
        %v477 = vsel %vm476, %v467, -1e+30
        %v478 = vsel %vm425, %v477, -inf
        %479 = vmax.xlane.f32.xlu0 %v478
        %v480 = vpop.xlane.xlu0 %479
        %v481 = vsub.f32 %v477, %v480
        %v482 = vmul.f32 %v481, 1.442695
        %v483 = vpow.pop %v482
        %v484 = vsel %vm425, %v483, 0.0
        %485 = vadd.xlane.f32.xlu0 %v484
        %v486 = vpop.xlane.xlu0 %485
        %v487 = vrcp.pop %v486
        %v488 = vmul.f32 %v483, %v487
        %v489 = vpack.c.bf16 %v488, %v488
        %491 = vrot.lane.b32.xlu0 %v386, 112
        %v492 = vpop.permute.xlu0 %491
        %v494 = vsel %vm425, %v489, 0
        %vm496 = vcmask 1043456
        %v498 = vsel %vm496, %v492, 0
        %500 = vmatprep.subr.bf16.mxu0 0
        %501 = vmatpush1.bf16.msra.mxu0 %v498
        %502 = vmatprep.subr.bf16.mxu0 0
        %503 = vmatpush1.bf16.msra.mxu0 0
        %504 = vmatprep.subr.bf16.mxu0 0
        %505 = vmatpush1.bf16.msra.mxu0 0
        %506 = vmatprep.subr.bf16.mxu0 0
        %507 = vmatpush1.bf16.msra.mxu0 0
        %508 = vmatprep.subr.bf16.mxu0 0
        %509 = vmatpush1.bf16.msra.mxu0 0
        %510 = vmatprep.subr.bf16.mxu0 0
        %511 = vmatpush1.bf16.msra.mxu0 0
        %512 = vmatprep.subr.bf16.mxu0 0
        %513 = vmatpush1.bf16.msra.mxu0 0
        %514 = vmatprep.subr.bf16.mxu0 0
        %515 = vmatpush1.bf16.msra.mxu0 0
        %516 = vmatprep.subr.bf16.mxu0 0
        %517 = vmatpush1.bf16.msra.mxu0 0
        %518 = vmatprep.subr.bf16.mxu0 0
        %519 = vmatpush1.bf16.msra.mxu0 0
        %520 = vmatprep.subr.bf16.mxu0 0
        %521 = vmatpush1.bf16.msra.mxu0 0
        %522 = vmatprep.subr.bf16.mxu0 0
        %523 = vmatpush1.bf16.msra.mxu0 0
        %524 = vmatprep.subr.bf16.mxu0 0
        %525 = vmatpush1.bf16.msra.mxu0 0
        %526 = vmatprep.subr.bf16.mxu0 0
        %527 = vmatpush1.bf16.msra.mxu0 0
        %528 = vmatprep.subr.bf16.mxu0 0
        %529 = vmatpush1.bf16.msra.mxu0 0
        %530 = vmatprep.subr.bf16.mxu0 0
        %531 = vmatpush1.bf16.msra.mxu0 0
        %532 = vmatprep.mubr.bf16.mxu0 0
        %533 = vmatmul.mubr.bf16.gmra.mrb[0].mxu0 %v494
        %v534 = vpop.f32.mrb[0].mxu0
        %v535 = vadd.f32 0.0, %v534
        %v536 = vpop.f32.mrb[0].mxu0
        %v537 = vpop.f32.mrb[0].mxu0
        %v538 = vpop.f32.mrb[0].mxu0
        %539 = vdwg.mxu0
        %v540 = vpack.c.bf16 %v535, %v535
        %v541 = vld [vmem:[#allocation3] sm:$0xff]
        %v542 = vld [vmem:[%s295] sm:$0xf]
        %v544 = vsel %vm425, %v540, 0
        %v547 = vsel %vm496, %v542, 0
        %549 = vmatprep.subr.bf16.mxu0 0
        %550 = vmatpush1.bf16.msra.mxu0 %v547
        %551 = vmatprep.subr.bf16.mxu0 0
        %552 = vmatpush1.bf16.msra.mxu0 0
        %553 = vmatprep.subr.bf16.mxu0 0
        %554 = vmatpush1.bf16.msra.mxu0 0
        %555 = vmatprep.subr.bf16.mxu0 0
        %556 = vmatpush1.bf16.msra.mxu0 0
        %557 = vmatprep.subr.bf16.mxu0 0
        %558 = vmatpush1.bf16.msra.mxu0 0
        %559 = vmatprep.subr.bf16.mxu0 0
        %560 = vmatpush1.bf16.msra.mxu0 0
        %561 = vmatprep.subr.bf16.mxu0 0
        %562 = vmatpush1.bf16.msra.mxu0 0
        %563 = vmatprep.subr.bf16.mxu0 0
        %564 = vmatpush1.bf16.msra.mxu0 0
        %565 = vmatprep.subr.bf16.mxu0 0
        %566 = vmatpush1.bf16.msra.mxu0 0
        %567 = vmatprep.subr.bf16.mxu0 0
        %568 = vmatpush1.bf16.msra.mxu0 0
        %569 = vmatprep.subr.bf16.mxu0 0
        %570 = vmatpush1.bf16.msra.mxu0 0
        %571 = vmatprep.subr.bf16.mxu0 0
        %572 = vmatpush1.bf16.msra.mxu0 0
        %573 = vmatprep.subr.bf16.mxu0 0
        %574 = vmatpush1.bf16.msra.mxu0 0
        %575 = vmatprep.subr.bf16.mxu0 0
        %576 = vmatpush1.bf16.msra.mxu0 0
        %577 = vmatprep.subr.bf16.mxu0 0
        %578 = vmatpush1.bf16.msra.mxu0 0
        %579 = vmatprep.subr.bf16.mxu0 0
        %580 = vmatpush1.bf16.msra.mxu0 0
        %581 = vmatprep.mubr.bf16.mxu0 0
        %582 = vmatmul.mubr.bf16.gmra.mrb[0].mxu0 %v544
        %v583 = vpop.f32.mrb[0].mxu0
        %v584 = vadd.f32 0.0, %v583
        %v585 = vpop.f32.mrb[0].mxu0
        %v586 = vpop.f32.mrb[0].mxu0
        %v587 = vpop.f32.mrb[0].mxu0
        %588 = vdwg.mxu0
        %v589 = vadd.f32 %v541, %v584
        %590 = vst.msk [vmem:[#allocation3] sm:$0xff] %vm341, %v589
        %p591 = scmp.eq.s32.totalorder %s25, 3
        // Predicated region
        $region49: #{tpu_custom_call.1} parent=43 // pred_check
          %p592 = pneg %p591
        $region50: #{tpu_custom_call.1} parent=43 // pred_check_branch
          %594 = sbr.rel (%p592) target = $region52
        $region51: #{tpu_custom_call.1} parent=43 // pred_region
          %v595 = vld [vmem:[%s286] sm:$0xff]
          %v596 = vld [vmem:[#allocation3] sm:$0xff]
          %v597 = vadd.f32 %v595, %v596
          %598 = vst.msk [vmem:[%s282] sm:$0xff] %vm341, %v597
        $region52: #{tpu_custom_call.1} parent=43 // pred_fallthru
          _
        %s599 = sand.u32 %s181, 1
        %s600 = scalar_lea.sflag [#allocation5], %s599
        %s601 = sand.u32 %s181, 1
        %s602 = smul.addr %s601, 8
        %s603 = scalar_lea.vmem [#allocation4], %s602
        // Predicated region
        $region53: #{tpu_custom_call.1} parent=43 // pred_check
          %p604 = pneg %p191
        $region54: #{tpu_custom_call.1} parent=43 // pred_check_branch
          %606 = sbr.rel (%p604) target = $region56
        $region55: #{tpu_custom_call.1} parent=43 // pred_region
          %s608 = ssub.s32 128, 128
          %609 = vsyncadd %s600, %s608
          %s610 = smul.addr %s24, 128
          %s611 = scalar_lea.hbm %s6, %s610
          %s613 = sshll.u32 %s603, 4
          %s614 = int_to_ptr.vmem [resolvable:$true] %s613
          %616 = dma.vmem_to_hbm [thread:$0]  %s614, 128, %s611, %s600
        $region56: #{tpu_custom_call.1} parent=43 // pred_fallthru
          _
      $region44: #{tpu_custom_call.1} parent=5 // pred_fallthru
        _
      %p617 = scmp.le.s32.totalorder 2, %s15
      // Predicated region
      $region57: #{tpu_custom_call.1} parent=5 // pred_check
        %p618 = pneg %p617
      $region58: #{tpu_custom_call.1} parent=5 // pred_check_branch
        %620 = sbr.rel (%p618) target = $region60
      $region59: #{tpu_custom_call.1} parent=5 // pred_region
        %s621 = ssub.s32 %s15, 2
        // Predicated region
        $region61: #{tpu_custom_call.1} parent=59 // pred_check
          %p622 = pneg %p197
        $region62: #{tpu_custom_call.1} parent=59 // pred_check_branch
          %624 = sbr.rel (%p622) target = $region64
        $region63: #{tpu_custom_call.1} parent=59 // pred_region
          %s625 = sand.u32 %s182, 1
          %s626 = scalar_lea.sflag [#allocation5], %s625
          %s627 = sand.u32 %s182, 1
          %s628 = smul.addr %s627, 8
          %s629 = scalar_lea.vmem [#allocation4], %s628
          %630 = dma.done %s626, 128
        $region64: #{tpu_custom_call.1} parent=59 // pred_fallthru
          _
      $region60: #{tpu_custom_call.1} parent=5 // pred_fallthru
        _
    $region6: #{tpu_custom_call.1} parent=1 // loop_footer
      %s19 = sadd.s32 1, %s15
    $region7: #{tpu_custom_call.1} parent=1 // loop_footer_branch
      %14 = sbr.rel target = $region3
    $region8: #{tpu_custom_call.1} parent=1 // loop_exit
      _
    %631 = vsyncpa [#allocation5], 1
    %s632 = scalar_lea.sflag [#allocation5], 1
    %633 = vsyncpa %s632, 1

// kernel: tpu_custom_call.1
$region0: #{tpu_custom_call.1}
  #allocation0 [shape = 'u32[]', space=smem, size = 0x4, offset = 0x4, fixed_abs, tag = 'smem constant byte address 0x4 - core index']
  #allocation1 [shape = 'u32[144,128]{1,0:T(1,128)}', space=vmem, size = 0x12000, scoped, tag = 'internal scratch']
  #allocation2 [shape = 'bf16[8,32]{1,0:T(8,128)(2,1)}', space=vmem, size = 0x800, scoped, tag = 'scratch operand']
  #allocation3 [shape = 'f32[8,32]{1,0:T(8,128)}', space=vmem, size = 0x1000, scoped, tag = 'scratch operand']
  %s0 = inlined_call_operand.vmem [shape: f32[2,8,32], index: 0, kind: input, shape index: {}]
  %s1 = inlined_call_operand.vmem [shape: f32[8,8], index: 1, kind: input, shape index: {}]
  %s2 = inlined_call_operand.vmem [shape: f32[8,8], index: 2, kind: input, shape index: {}]
  %s3 = inlined_call_operand.vmem [shape: f32[1,32], index: 3, kind: input, shape index: {}]
  %s4 = inlined_call_operand.vmem [shape: bf16[4,32,24], index: 4, kind: input, shape index: {}]
  %s5 = inlined_call_operand.vmem [shape: bf16[4,8,32], index: 5, kind: input, shape index: {}]
  %s6 = inlined_call_operand.hbm [shape: f32[2,8,32], index: 6, kind: output, shape index: {}]
  %s7 = sld [smem:[#allocation0]]
  $region65: #{tpu_custom_call.1} parent=0
    _
  %s9 = ssub.s32 1, %s7
  %s10 = scalar_select 0, %s9, %s7
  $region1: #{tpu_custom_call.1} parent=0
    #allocation4 [shape = 'u8[8192]{0}', space=vmem, size = 0x2000, scoped, tag = 'output window, operand 0']
    #allocation5 [shape = 's32[2]{0}', space=sflag, size = 0x8, scoped, tag = 'scoped memory for tpu_custom_call.1']
    %11 = vsyncpa [#allocation5], 0
    %s12 = scalar_lea.sflag [#allocation5], 1
    %13 = vsyncpa %s12, 0
    loop: start=0, step=1, limit=10
    $region2: #{tpu_custom_call.1} parent=1 // loop_pre_header
      _
    $region3: #{tpu_custom_call.1} parent=1 // loop_header
      %s15 = sphi 0, %s19
      %p16 = scmp.ge.s32.totalorder %s15, 10
      %s22 = sphi 0, %s34
      %s23 = sphi 0, %s30
      %s24 = sphi 0, %s22
      %s25 = sphi 0, %s23
      %s26 = sphi 0, %s24
      %s27 = sphi 0, %s25
      %s37 = sphi 0, %s39
      %s40 = sphi 0, %s37
      %s41 = sphi 0, %s40
      %s57 = sphi 0, %s41
      %s61 = sphi 0, %s61
      %s63 = sphi 0, %s61
      %s64 = sphi 0, %s63
      %s78 = sphi 0, %s64
      %s82 = sphi 0, %s82
      %s84 = sphi 0, %s82
      %s85 = sphi 0, %s84
      %s99 = sphi 0, %s85
      %s103 = sphi 0, %s103
      %s105 = sphi 0, %s103
      %s106 = sphi 0, %s105
      %s120 = sphi 0, %s106
      %s126 = sphi 0, %s128
      %s129 = sphi 0, %s126
      %s130 = sphi 0, %s129
      %s146 = sphi 0, %s130
      %s152 = sphi 0, %s154
      %s155 = sphi 0, %s152
      %s156 = sphi 0, %s155
      %s172 = sphi 0, %s156
      %s178 = sphi 0, %s180
      %s181 = sphi 0, %s178
      %s182 = sphi 0, %s181
      %s198 = sphi 0, %s182
    $region4: #{tpu_custom_call.1} parent=1 // loop_header_branch
      %18 = sbr.rel (%p16) target = $region8
    $region5: #{tpu_custom_call.1} parent=1 // loop_body
      %s20 = ssub.s32 %s15, 1
      %s21 = ssub.s32 %s15, 2
      %s28 = sadd.s32 1, %s23
      %p29 = scmp.ge.s32.totalorder %s28, 4
      %s30 = scalar_select %p29, 0, %s28
      %s31 = sadd.s32 1, %s22
      %s32 = scalar_select %p29, %s31, %s22
      %p33 = scmp.ge.s32.totalorder %s32, 2
      %s34 = scalar_select %p33, 0, %s32
      %s35 = ssub.s32 %s22, %s34
      %p36 = scmp.eq.s32.totalorder %s35, 0
      %s38 = sadd.s32 %s37, 1
      %s39 = scalar_select %p36, %s37, %s38
      %p42 = pneg %p36
      %p43 = scmp.eq.s32.totalorder %s15, 7
      %p44 = por %p42, %p43
      %p45 = scmp.ne.s32.totalorder %s37, %s40
      %p46 = scmp.eq.s32.totalorder %s15, 0
      %p47 = por %p45, %p46
      %p48 = scmp.ne.s32.totalorder %s37, %s40
      %p49 = scmp.eq.s32.totalorder %s20, 7
      %p50 = por %p48, %p49
      %p51 = scmp.ne.s32.totalorder %s40, %s41
      %p52 = scmp.eq.s32.totalorder %s20, 0
      %p53 = por %p51, %p52
      %p54 = scmp.ne.s32.totalorder %s40, %s41
      %p55 = scmp.eq.s32.totalorder %s21, 7
      %p56 = por %p54, %p55
      %p58 = scmp.ne.s32.totalorder %s41, %s57
      %p59 = scmp.eq.s32.totalorder %s21, 0
      %p60 = por %p58, %p59
      %s62 = sadd.s32 %s61, 1
      %p65 = scmp.eq.s32.totalorder %s15, 7
      %p66 = scmp.ne.s32.totalorder %s61, %s63
      %p67 = scmp.eq.s32.totalorder %s15, 0
      %p68 = por %p66, %p67
      %p69 = scmp.ne.s32.totalorder %s61, %s63
      %p70 = scmp.eq.s32.totalorder %s20, 7
      %p71 = por %p69, %p70
      %p72 = scmp.ne.s32.totalorder %s63, %s64
      %p73 = scmp.eq.s32.totalorder %s20, 0
      %p74 = por %p72, %p73
      %p75 = scmp.ne.s32.totalorder %s63, %s64
      %p76 = scmp.eq.s32.totalorder %s21, 7
      %p77 = por %p75, %p76
      %p79 = scmp.ne.s32.totalorder %s64, %s78
      %p80 = scmp.eq.s32.totalorder %s21, 0
      %p81 = por %p79, %p80
      %s83 = sadd.s32 %s82, 1
      %p86 = scmp.eq.s32.totalorder %s15, 7
      %p87 = scmp.ne.s32.totalorder %s82, %s84
      %p88 = scmp.eq.s32.totalorder %s15, 0
      %p89 = por %p87, %p88
      %p90 = scmp.ne.s32.totalorder %s82, %s84
      %p91 = scmp.eq.s32.totalorder %s20, 7
      %p92 = por %p90, %p91
      %p93 = scmp.ne.s32.totalorder %s84, %s85
      %p94 = scmp.eq.s32.totalorder %s20, 0
      %p95 = por %p93, %p94
      %p96 = scmp.ne.s32.totalorder %s84, %s85
      %p97 = scmp.eq.s32.totalorder %s21, 7
      %p98 = por %p96, %p97
      %p100 = scmp.ne.s32.totalorder %s85, %s99
      %p101 = scmp.eq.s32.totalorder %s21, 0
      %p102 = por %p100, %p101
      %s104 = sadd.s32 %s103, 1
      %p107 = scmp.eq.s32.totalorder %s15, 7
      %p108 = scmp.ne.s32.totalorder %s103, %s105
      %p109 = scmp.eq.s32.totalorder %s15, 0
      %p110 = por %p108, %p109
      %p111 = scmp.ne.s32.totalorder %s103, %s105
      %p112 = scmp.eq.s32.totalorder %s20, 7
      %p113 = por %p111, %p112
      %p114 = scmp.ne.s32.totalorder %s105, %s106
      %p115 = scmp.eq.s32.totalorder %s20, 0
      %p116 = por %p114, %p115
      %p117 = scmp.ne.s32.totalorder %s105, %s106
      %p118 = scmp.eq.s32.totalorder %s21, 7
      %p119 = por %p117, %p118
      %p121 = scmp.ne.s32.totalorder %s106, %s120
      %p122 = scmp.eq.s32.totalorder %s21, 0
      %p123 = por %p121, %p122
      %s124 = ssub.s32 %s23, %s30
      %p125 = scmp.eq.s32.totalorder %s124, 0
      %s127 = sadd.s32 %s126, 1
      %s128 = scalar_select %p125, %s126, %s127
      %p131 = pneg %p125
      %p132 = scmp.eq.s32.totalorder %s15, 7
      %p133 = por %p131, %p132
      %p134 = scmp.ne.s32.totalorder %s126, %s129
      %p135 = scmp.eq.s32.totalorder %s15, 0
      %p136 = por %p134, %p135
      %p137 = scmp.ne.s32.totalorder %s126, %s129
      %p138 = scmp.eq.s32.totalorder %s20, 7
      %p139 = por %p137, %p138
      %p140 = scmp.ne.s32.totalorder %s129, %s130
      %p141 = scmp.eq.s32.totalorder %s20, 0
      %p142 = por %p140, %p141
      %p143 = scmp.ne.s32.totalorder %s129, %s130
      %p144 = scmp.eq.s32.totalorder %s21, 7
      %p145 = por %p143, %p144
      %p147 = scmp.ne.s32.totalorder %s130, %s146
      %p148 = scmp.eq.s32.totalorder %s21, 0
      %p149 = por %p147, %p148
      %s150 = ssub.s32 %s23, %s30
      %p151 = scmp.eq.s32.totalorder %s150, 0
      %s153 = sadd.s32 %s152, 1
      %s154 = scalar_select %p151, %s152, %s153
      %p157 = pneg %p151
      %p158 = scmp.eq.s32.totalorder %s15, 7
      %p159 = por %p157, %p158
      %p160 = scmp.ne.s32.totalorder %s152, %s155
      %p161 = scmp.eq.s32.totalorder %s15, 0
      %p162 = por %p160, %p161
      %p163 = scmp.ne.s32.totalorder %s152, %s155
      %p164 = scmp.eq.s32.totalorder %s20, 7
      %p165 = por %p163, %p164
      %p166 = scmp.ne.s32.totalorder %s155, %s156
      %p167 = scmp.eq.s32.totalorder %s20, 0
      %p168 = por %p166, %p167
      %p169 = scmp.ne.s32.totalorder %s155, %s156
      %p170 = scmp.eq.s32.totalorder %s21, 7
      %p171 = por %p169, %p170
      %p173 = scmp.ne.s32.totalorder %s156, %s172
      %p174 = scmp.eq.s32.totalorder %s21, 0
      %p175 = por %p173, %p174
      %s176 = ssub.s32 %s22, %s34
      %p177 = scmp.eq.s32.totalorder %s176, 0
      %s179 = sadd.s32 %s178, 1
      %s180 = scalar_select %p177, %s178, %s179
      %p183 = pneg %p177
      %p184 = scmp.eq.s32.totalorder %s15, 7
      %p185 = por %p183, %p184
      %p186 = scmp.ne.s32.totalorder %s178, %s181
      %p187 = scmp.eq.s32.totalorder %s15, 0
      %p188 = por %p186, %p187
      %p189 = scmp.ne.s32.totalorder %s178, %s181
      %p190 = scmp.eq.s32.totalorder %s20, 7
      %p191 = por %p189, %p190
      %p192 = scmp.ne.s32.totalorder %s181, %s182
      %p193 = scmp.eq.s32.totalorder %s20, 0
      %p194 = por %p192, %p193
      %p195 = scmp.ne.s32.totalorder %s181, %s182
      %p196 = scmp.eq.s32.totalorder %s21, 7
      %p197 = por %p195, %p196
      %p199 = scmp.ne.s32.totalorder %s182, %s198
      %p200 = scmp.eq.s32.totalorder %s21, 0
      %p201 = por %p199, %p200
      %p202 = scmp.le.s32.totalorder 1, %s15
      %p203 = scmp.lt.s32.totalorder %s15, 9
      %p204 = pnand %p202, %p203
      %p205 = pneg %p204
      // Predicated region
      $region9: #{tpu_custom_call.1} parent=5 // pred_check
        _
      $region10: #{tpu_custom_call.1} parent=5 // pred_check_branch
        %207 = sbr.rel (%p204) target = $region12
      $region11: #{tpu_custom_call.1} parent=5 // pred_region
        %s208 = ssub.s32 %s15, 1
        // Predicated region
        $region13: #{tpu_custom_call.1} parent=11 // pred_check
          %p209 = pneg %p74
        $region14: #{tpu_custom_call.1} parent=11 // pred_check_branch
          %211 = sbr.rel (%p209) target = $region16
        $region15: #{tpu_custom_call.1} parent=11 // pred_region
          _
        $region16: #{tpu_custom_call.1} parent=11 // pred_fallthru
          _
        // Predicated region
        $region17: #{tpu_custom_call.1} parent=11 // pred_check
          %p212 = pneg %p95
        $region18: #{tpu_custom_call.1} parent=11 // pred_check_branch
          %214 = sbr.rel (%p212) target = $region20
        $region19: #{tpu_custom_call.1} parent=11 // pred_region
          _
        $region20: #{tpu_custom_call.1} parent=11 // pred_fallthru
          _
        // Predicated region
        $region21: #{tpu_custom_call.1} parent=11 // pred_check
          %p215 = pneg %p116
        $region22: #{tpu_custom_call.1} parent=11 // pred_check_branch
          %217 = sbr.rel (%p215) target = $region24
        $region23: #{tpu_custom_call.1} parent=11 // pred_region
          _
        $region24: #{tpu_custom_call.1} parent=11 // pred_fallthru
          _
      $region12: #{tpu_custom_call.1} parent=5 // pred_fallthru
        _
      %p218 = scmp.lt.s32.totalorder %s15, 8
      // Predicated region
      $region25: #{tpu_custom_call.1} parent=5 // pred_check
        %p219 = pneg %p218
      $region26: #{tpu_custom_call.1} parent=5 // pred_check_branch
        %221 = sbr.rel (%p219) target = $region28
      $region27: #{tpu_custom_call.1} parent=5 // pred_region
        // Predicated region
        $region29: #{tpu_custom_call.1} parent=27 // pred_check
          %p222 = pneg %p47
        $region30: #{tpu_custom_call.1} parent=27 // pred_check_branch
          %224 = sbr.rel (%p222) target = $region32
        $region31: #{tpu_custom_call.1} parent=27 // pred_region
          %p225 = scmp.lt.s32.totalorder %s22, 1
          %s226 = scalar_select %p225, %s22, 1
          %s227 = smul.addr %s226, 8
          %s228 = scalar_lea.vmem %s0, %s227
        $region32: #{tpu_custom_call.1} parent=27 // pred_fallthru
          _
        // Predicated region
        $region33: #{tpu_custom_call.1} parent=27 // pred_check
          %p229 = pneg %p136
        $region34: #{tpu_custom_call.1} parent=27 // pred_check_branch
          %231 = sbr.rel (%p229) target = $region36
        $region35: #{tpu_custom_call.1} parent=27 // pred_region
          %p232 = scmp.lt.s32.totalorder %s23, 3
          %s233 = scalar_select %p232, %s23, 3
          %s234 = smul.addr %s233, 4
          %s235 = smul.addr %s234, 4
          %s236 = scalar_lea.vmem %s4, %s235
        $region36: #{tpu_custom_call.1} parent=27 // pred_fallthru
          _
        // Predicated region
        $region37: #{tpu_custom_call.1} parent=27 // pred_check
          %p237 = pneg %p162
        $region38: #{tpu_custom_call.1} parent=27 // pred_check_branch
          %239 = sbr.rel (%p237) target = $region40
        $region39: #{tpu_custom_call.1} parent=27 // pred_region
          %p240 = scmp.lt.s32.totalorder %s23, 3
          %s241 = scalar_select %p240, %s23, 3
          %s242 = smul.addr %s241, 4
          %s243 = scalar_lea.vmem %s5, %s242
        $region40: #{tpu_custom_call.1} parent=27 // pred_fallthru
          _
      $region28: #{tpu_custom_call.1} parent=5 // pred_fallthru
        _
      %p244 = scmp.le.s32.totalorder 1, %s15
      %p245 = scmp.lt.s32.totalorder %s15, 9
      %p246 = pnand %p244, %p245
      %p247 = pneg %p246
      // Predicated region
      $region41: #{tpu_custom_call.1} parent=5 // pred_check
        _
      $region42: #{tpu_custom_call.1} parent=5 // pred_check_branch
        %249 = sbr.rel (%p246) target = $region44
      $region43: #{tpu_custom_call.1} parent=5 // pred_region
        %s250 = ssub.s32 %s15, 1
        %p251 = scmp.lt.s32.totalorder %s24, 1
        %s252 = scalar_select %p251, %s24, 1
        %s253 = smul.addr %s252, 8
        %s254 = scalar_lea.vmem %s0, %s253
        %p255 = pneg %p53
        %p256 = pneg %p50
        %p257 = pneg %p74
        %p258 = pneg %p71
        %p259 = pneg %p95
        %p260 = pneg %p92
        %p261 = pneg %p116
        %p262 = pneg %p113
        %p263 = scmp.lt.s32.totalorder %s25, 3
        %s264 = scalar_select %p263, %s25, 3
        %s265 = smul.addr %s264, 4
        %s266 = smul.addr %s265, 4
        %s267 = scalar_lea.vmem %s4, %s266
        %p268 = pneg %p142
        %p269 = pneg %p139
        %p270 = scmp.lt.s32.totalorder %s25, 3
        %s271 = scalar_select %p270, %s25, 3
        %s272 = smul.addr %s271, 4
        %s273 = scalar_lea.vmem %s5, %s272
        %p274 = pneg %p168
        %p275 = pneg %p165
        %p276 = pneg %p194
        %p277 = pneg %p191
        %s278 = sand.u32 %s181, 1
        %s279 = scalar_lea.sflag [#allocation5], %s278
        %s280 = sand.u32 %s181, 1
        %s281 = smul.addr %s280, 8
        %s282 = scalar_lea.vmem [#allocation4], %s281
        %p283 = scmp.lt.s32.totalorder %s24, 1
        %s284 = scalar_select %p283, %s24, 1
        %s285 = smul.addr %s284, 8
        %s286 = scalar_lea.vmem %s0, %s285
        %p287 = scmp.lt.s32.totalorder %s25, 3
        %s288 = scalar_select %p287, %s25, 3
        %s289 = smul.addr %s288, 4
        %s290 = smul.addr %s289, 4
        %s291 = scalar_lea.vmem %s4, %s290
        %p292 = scmp.lt.s32.totalorder %s25, 3
        %s293 = scalar_select %p292, %s25, 3
        %s294 = smul.addr %s293, 4
        %s295 = scalar_lea.vmem %s5, %s294
        %p297 = scmp.eq.s32.totalorder %s25, 0
        // Predicated region
        $region45: #{tpu_custom_call.1} parent=43 // pred_check
          %p298 = pneg %p297
        $region46: #{tpu_custom_call.1} parent=43 // pred_check_branch
          %300 = sbr.rel (%p298) target = $region48
        $region47: #{tpu_custom_call.1} parent=43 // pred_region
          %v301 = vld [vmem:[%s286] sm:$0xff]
          %v302 = vmul.f32 %v301, %v301
          %vm303 = vcmask 261120
          %v304 = vsel %vm303, %v302, 0.0
          %305 = vadd.xlane.f32.xlu0 %v304
          %v306 = vpop.xlane.xlu0 %305
          %v307 = vrcp.pop 32.0
          %v308 = vmul.f32 %v306, %v307
          %v309 = vadd.f32 %v308, 1e-06
          %v310 = vrsqrt.pop %v309
          %v311 = vmul.f32 %v301, %v310
          %v312 = vld [vmem:[%s3] sm:$0x1]
          %v314 = vlaneseq
          %v315 = vshrl.u32 %v314, 7
          %v316 = vsub.s32 0, %v315
          %v317 = vrot.slane %v312, %v316
          %v319 = vmul.f32 %v311, %v317
          %v320 = vpack.c.bf16 %v319, %v319
          %vm321 = vcmask 257024
          %322 = vst.msk [vmem:[#allocation2] sm:$0xf] %vm321, %v320
          %323 = vst.msk [vmem:[#allocation3] sm:$0xff] %vm303, 0.0
        $region48: #{tpu_custom_call.1} parent=43 // pred_fallthru
          _
        %v324 = vld [vmem:[#allocation2] sm:$0xf]
        %v325 = vld [vmem:[%s291] sm:$0xf]
        %v326 = vld [vmem:[%s291 + $0x4] sm:$0xf]
        %v327 = vld [vmem:[%s291 + $0x8] sm:$0xf]
        %v328 = vld [vmem:[%s291 + $0xc] sm:$0xf]
        %v333 = vunpack.c.l.b16 %v325
        %v334 = vunpack.c.l.b16 %v326
        %v335 = vunpack.c.l.b16 %v327
        %v336 = vunpack.c.l.b16 %v328
        %v337 = vpack.c.b16 %v334, %v333
        %v338 = vpack.c.b16 %v336, %v335
        %vm341 = vcmask 261120
        %v343 = vsel %vm341, %v324, 0
        %345 = vmatprep.subr.bf16.mxu0 0
        %346 = vmatpush1.bf16.msra.mxu0 %v337
        %347 = vmatprep.subr.bf16.mxu0 0
        %348 = vmatpush1.bf16.msra.mxu0 %v338
        %349 = vmatprep.subr.bf16.mxu0 0
        %350 = vmatpush1.bf16.msra.mxu0 0
        %351 = vmatprep.subr.bf16.mxu0 0
        %352 = vmatpush1.bf16.msra.mxu0 0
        %353 = vmatprep.subr.bf16.mxu0 0
        %354 = vmatpush1.bf16.msra.mxu0 0
        %355 = vmatprep.subr.bf16.mxu0 0
        %356 = vmatpush1.bf16.msra.mxu0 0
        %357 = vmatprep.subr.bf16.mxu0 0
        %358 = vmatpush1.bf16.msra.mxu0 0
        %359 = vmatprep.subr.bf16.mxu0 0
        %360 = vmatpush1.bf16.msra.mxu0 0
        %361 = vmatprep.subr.bf16.mxu0 0
        %362 = vmatpush1.bf16.msra.mxu0 0
        %363 = vmatprep.subr.bf16.mxu0 0
        %364 = vmatpush1.bf16.msra.mxu0 0
        %365 = vmatprep.subr.bf16.mxu0 0
        %366 = vmatpush1.bf16.msra.mxu0 0
        %367 = vmatprep.subr.bf16.mxu0 0
        %368 = vmatpush1.bf16.msra.mxu0 0
        %369 = vmatprep.subr.bf16.mxu0 0
        %370 = vmatpush1.bf16.msra.mxu0 0
        %371 = vmatprep.subr.bf16.mxu0 0
        %372 = vmatpush1.bf16.msra.mxu0 0
        %373 = vmatprep.subr.bf16.mxu0 0
        %374 = vmatpush1.bf16.msra.mxu0 0
        %375 = vmatprep.subr.bf16.mxu0 0
        %376 = vmatpush1.bf16.msra.mxu0 0
        %377 = vmatprep.mubr.bf16.mxu0 0
        %378 = vmatmul.mubr.bf16.gmra.mrb[0].mxu0 %v343
        %v379 = vpop.f32.mrb[0].mxu0
        %v380 = vadd.f32 0.0, %v379
        %v381 = vpop.f32.mrb[0].mxu0
        %v382 = vpop.f32.mrb[0].mxu0
        %v383 = vpop.f32.mrb[0].mxu0
        %384 = vdwg.mxu0
        %v385 = vmul.f32 %v380, 0.35355338
        %v386 = vpack.c.bf16 %v380, %v380
        %v387 = vld [vmem:[%s1] sm:$0xff]
        %v388 = vld [vmem:[%s2] sm:$0xff]
        %390 = vrot.lane.b32.xlu0 %v385, 124
        %v391 = vpop.permute.xlu0 %390
        %393 = vrot.lane.b32.xlu0 %v385, 4
        %v394 = vpop.permute.xlu0 %393
        %vm396 = vcmask 31744
        %v397 = vsel %vm396, %v391, %v394
        %399 = vrot.lane.b32.xlu0 %v380, 116
        %v400 = vpop.permute.xlu0 %399
        %402 = vrot.lane.b32.xlu0 %v380, 124
        %v403 = vpop.permute.xlu0 %402
        %v405 = vsel %vm396, %v400, %v403
        %v406 = vmul.f32 %v385, %v387
        %v407 = vmul.f32 %v397, %v388
        %v408 = vadd.f32 %v406, %v407
        %v409 = vpack.c.bf16 %v408, %v408
        %411 = vrot.lane.b32.xlu0 %v387, 8
        %v412 = vpop.permute.xlu0 %411
        %v414 = vmul.f32 %v380, %v412
        %v415 = vmul.f32 %v405, %v388
        %417 = vrot.lane.b32.xlu0 %v415, 8
        %v418 = vpop.permute.xlu0 %417
        %v420 = vadd.f32 %v414, %v418
        %v421 = vpack.c.bf16 %v420, %v420
        %423 = vrot.lane.b32.xlu0 %v421, 120
        %v424 = vpop.permute.xlu0 %423
        %vm425 = vcmask 64512
        %v427 = vsel %vm425, %v409, 0
        %v430 = vsel %vm425, %v424, 0
        %432 = vmatprep.subr.bf16.mxu0 0
        %433 = vmatpush1.bf16.xpose.msra.mxu0 %v430
        %434 = vmatprep.subr.bf16.mxu0 0
        %435 = vmatpush1.bf16.xpose.msra.mxu0 0
        %436 = vmatprep.subr.bf16.mxu0 0
        %437 = vmatpush1.bf16.xpose.msra.mxu0 0
        %438 = vmatprep.subr.bf16.mxu0 0
        %439 = vmatpush1.bf16.xpose.msra.mxu0 0
        %440 = vmatprep.subr.bf16.mxu0 0
        %441 = vmatpush1.bf16.xpose.msra.mxu0 0
        %442 = vmatprep.subr.bf16.mxu0 0
        %443 = vmatpush1.bf16.xpose.msra.mxu0 0
        %444 = vmatprep.subr.bf16.mxu0 0
        %445 = vmatpush1.bf16.xpose.msra.mxu0 0
        %446 = vmatprep.subr.bf16.mxu0 0
        %447 = vmatpush1.bf16.xpose.msra.mxu0 0
        %448 = vmatprep.subr.bf16.mxu0 0
        %449 = vmatpush1.bf16.xpose.msra.mxu0 0
        %450 = vmatprep.subr.bf16.mxu0 0
        %451 = vmatpush1.bf16.xpose.msra.mxu0 0
        %452 = vmatprep.subr.bf16.mxu0 0
        %453 = vmatpush1.bf16.xpose.msra.mxu0 0
        %454 = vmatprep.subr.bf16.mxu0 0
        %455 = vmatpush1.bf16.xpose.msra.mxu0 0
        %456 = vmatprep.subr.bf16.mxu0 0
        %457 = vmatpush1.bf16.xpose.msra.mxu0 0
        %458 = vmatprep.subr.bf16.mxu0 0
        %459 = vmatpush1.bf16.xpose.msra.mxu0 0
        %460 = vmatprep.subr.bf16.mxu0 0
        %461 = vmatpush1.bf16.xpose.msra.mxu0 0
        %462 = vmatprep.subr.bf16.mxu0 0
        %463 = vmatpush1.bf16.xpose.msra.mxu0 0
        %464 = vmatprep.mubr.bf16.mxu0 0
        %465 = vmatmul.mubr.bf16.gmra.mrb[0].mxu0 %v427
        %v466 = vpop.f32.mrb[0].mxu0
        %v467 = vadd.f32 0.0, %v466
        %v468 = vpop.f32.mrb[0].mxu0
        %v469 = vpop.f32.mrb[0].mxu0
        %v470 = vpop.f32.mrb[0].mxu0
        %471 = vdwg.mxu0
        %v472 = vlaneseq
        %v473 = vshrl.u32 %v472, 7
        %v474 = vlaneseq
        %v475 = vand.u32 %v474, 127
        %vm476 = vcmp.le.s32.totalorder %v475, %v473
        %v477 = vsel %vm476, %v467, -1e+30
        %v478 = vsel %vm425, %v477, -inf
        %479 = vmax.xlane.f32.xlu0 %v478
        %v480 = vpop.xlane.xlu0 %479
        %v481 = vsub.f32 %v477, %v480
        %v482 = vmul.f32 %v481, 1.442695
        %v483 = vpow.pop %v482
        %v484 = vsel %vm425, %v483, 0.0
        %485 = vadd.xlane.f32.xlu0 %v484
        %v486 = vpop.xlane.xlu0 %485
        %v487 = vrcp.pop %v486
        %v488 = vmul.f32 %v483, %v487
        %v489 = vpack.c.bf16 %v488, %v488
        %491 = vrot.lane.b32.xlu0 %v386, 112
        %v492 = vpop.permute.xlu0 %491
        %v494 = vsel %vm425, %v489, 0
        %vm496 = vcmask 1043456
        %v498 = vsel %vm496, %v492, 0
        %500 = vmatprep.subr.bf16.mxu0 0
        %501 = vmatpush1.bf16.msra.mxu0 %v498
        %502 = vmatprep.subr.bf16.mxu0 0
        %503 = vmatpush1.bf16.msra.mxu0 0
        %504 = vmatprep.subr.bf16.mxu0 0
        %505 = vmatpush1.bf16.msra.mxu0 0
        %506 = vmatprep.subr.bf16.mxu0 0
        %507 = vmatpush1.bf16.msra.mxu0 0
        %508 = vmatprep.subr.bf16.mxu0 0
        %509 = vmatpush1.bf16.msra.mxu0 0
        %510 = vmatprep.subr.bf16.mxu0 0
        %511 = vmatpush1.bf16.msra.mxu0 0
        %512 = vmatprep.subr.bf16.mxu0 0
        %513 = vmatpush1.bf16.msra.mxu0 0
        %514 = vmatprep.subr.bf16.mxu0 0
        %515 = vmatpush1.bf16.msra.mxu0 0
        %516 = vmatprep.subr.bf16.mxu0 0
        %517 = vmatpush1.bf16.msra.mxu0 0
        %518 = vmatprep.subr.bf16.mxu0 0
        %519 = vmatpush1.bf16.msra.mxu0 0
        %520 = vmatprep.subr.bf16.mxu0 0
        %521 = vmatpush1.bf16.msra.mxu0 0
        %522 = vmatprep.subr.bf16.mxu0 0
        %523 = vmatpush1.bf16.msra.mxu0 0
        %524 = vmatprep.subr.bf16.mxu0 0
        %525 = vmatpush1.bf16.msra.mxu0 0
        %526 = vmatprep.subr.bf16.mxu0 0
        %527 = vmatpush1.bf16.msra.mxu0 0
        %528 = vmatprep.subr.bf16.mxu0 0
        %529 = vmatpush1.bf16.msra.mxu0 0
        %530 = vmatprep.subr.bf16.mxu0 0
        %531 = vmatpush1.bf16.msra.mxu0 0
        %532 = vmatprep.mubr.bf16.mxu0 0
        %533 = vmatmul.mubr.bf16.gmra.mrb[0].mxu0 %v494
        %v534 = vpop.f32.mrb[0].mxu0
        %v535 = vadd.f32 0.0, %v534
        %v536 = vpop.f32.mrb[0].mxu0
        %v537 = vpop.f32.mrb[0].mxu0
        %v538 = vpop.f32.mrb[0].mxu0
        %539 = vdwg.mxu0
        %v540 = vpack.c.bf16 %v535, %v535
        %v541 = vld [vmem:[#allocation3] sm:$0xff]
        %v542 = vld [vmem:[%s295] sm:$0xf]
        %v544 = vsel %vm425, %v540, 0
        %v547 = vsel %vm496, %v542, 0
        %549 = vmatprep.subr.bf16.mxu0 0
        %550 = vmatpush1.bf16.msra.mxu0 %v547
        %551 = vmatprep.subr.bf16.mxu0 0
        %552 = vmatpush1.bf16.msra.mxu0 0
        %553 = vmatprep.subr.bf16.mxu0 0
        %554 = vmatpush1.bf16.msra.mxu0 0
        %555 = vmatprep.subr.bf16.mxu0 0
        %556 = vmatpush1.bf16.msra.mxu0 0
        %557 = vmatprep.subr.bf16.mxu0 0
        %558 = vmatpush1.bf16.msra.mxu0 0
        %559 = vmatprep.subr.bf16.mxu0 0
        %560 = vmatpush1.bf16.msra.mxu0 0
        %561 = vmatprep.subr.bf16.mxu0 0
        %562 = vmatpush1.bf16.msra.mxu0 0
        %563 = vmatprep.subr.bf16.mxu0 0
        %564 = vmatpush1.bf16.msra.mxu0 0
        %565 = vmatprep.subr.bf16.mxu0 0
        %566 = vmatpush1.bf16.msra.mxu0 0
        %567 = vmatprep.subr.bf16.mxu0 0
        %568 = vmatpush1.bf16.msra.mxu0 0
        %569 = vmatprep.subr.bf16.mxu0 0
        %570 = vmatpush1.bf16.msra.mxu0 0
        %571 = vmatprep.subr.bf16.mxu0 0
        %572 = vmatpush1.bf16.msra.mxu0 0
        %573 = vmatprep.subr.bf16.mxu0 0
        %574 = vmatpush1.bf16.msra.mxu0 0
        %575 = vmatprep.subr.bf16.mxu0 0
        %576 = vmatpush1.bf16.msra.mxu0 0
        %577 = vmatprep.subr.bf16.mxu0 0
        %578 = vmatpush1.bf16.msra.mxu0 0
        %579 = vmatprep.subr.bf16.mxu0 0
        %580 = vmatpush1.bf16.msra.mxu0 0
        %581 = vmatprep.mubr.bf16.mxu0 0
        %582 = vmatmul.mubr.bf16.gmra.mrb[0].mxu0 %v544
        %v583 = vpop.f32.mrb[0].mxu0
        %v584 = vadd.f32 0.0, %v583
        %v585 = vpop.f32.mrb[0].mxu0
        %v586 = vpop.f32.mrb[0].mxu0
        %v587 = vpop.f32.mrb[0].mxu0
        %588 = vdwg.mxu0
        %v589 = vadd.f32 %v541, %v584
        %590 = vst.msk [vmem:[#allocation3] sm:$0xff] %vm341, %v589
        %p591 = scmp.eq.s32.totalorder %s25, 3
        // Predicated region
        $region49: #{tpu_custom_call.1} parent=43 // pred_check
          %p592 = pneg %p591
        $region50: #{tpu_custom_call.1} parent=43 // pred_check_branch
          %594 = sbr.rel (%p592) target = $region52
        $region51: #{tpu_custom_call.1} parent=43 // pred_region
          %v595 = vld [vmem:[%s286] sm:$0xff]
          %v596 = vld [vmem:[#allocation3] sm:$0xff]
          %v597 = vadd.f32 %v595, %v596
          %598 = vst.msk [vmem:[%s282] sm:$0xff] %vm341, %v597
        $region52: #{tpu_custom_call.1} parent=43 // pred_fallthru
          _
        %s599 = sand.u32 %s181, 1
        %s600 = scalar_lea.sflag [#allocation5], %s599
        %s601 = sand.u32 %s181, 1
        %s602 = smul.addr %s601, 8
        %s603 = scalar_lea.vmem [#allocation4], %s602
        // Predicated region
        $region53: #{tpu_custom_call.1} parent=43 // pred_check
          %p604 = pneg %p191
        $region54: #{tpu_custom_call.1} parent=43 // pred_check_branch
          %606 = sbr.rel (%p604) target = $region56
        $region55: #{tpu_custom_call.1} parent=43 // pred_region
          %s608 = ssub.s32 128, 128
          %609 = vsyncadd %s600, %s608
          %s610 = smul.addr %s24, 128
          %s611 = scalar_lea.hbm %s6, %s610
          %s613 = sshll.u32 %s603, 4
          %s614 = int_to_ptr.vmem [resolvable:$true] %s613
          %616 = dma.vmem_to_hbm [thread:$0]  %s614, 128, %s611, %s600
        $region56: #{tpu_custom_call.1} parent=43 // pred_fallthru
          _
      $region44: #{tpu_custom_call.1} parent=5 // pred_fallthru
        _
      %p617 = scmp.le.s32.totalorder 2, %s15
      // Predicated region
      $region57: #{tpu_custom_call.1} parent=5 // pred_check
        %p618 = pneg %p617
      $region58: #{tpu_custom_call.1} parent=5 // pred_check_branch
        %620 = sbr.rel (%p618) target = $region60
      $region59: #{tpu_custom_call.1} parent=5 // pred_region
        %s621 = ssub.s32 %s15, 2
        // Predicated region
        $region61: #{tpu_custom_call.1} parent=59 // pred_check
          %p622 = pneg %p197
        $region62: #{tpu_custom_call.1} parent=59 // pred_check_branch
          %624 = sbr.rel (%p622) target = $region64
        $region63: #{tpu_custom_call.1} parent=59 // pred_region
          %s625 = sand.u32 %s182, 1
          %s626 = scalar_lea.sflag [#allocation5], %s625
          %s627 = sand.u32 %s182, 1
          %s628 = smul.addr %s627, 8
          %s629 = scalar_lea.vmem [#allocation4], %s628
          %630 = dma.done %s626, 128
        $region64: #{tpu_custom_call.1} parent=59 // pred_fallthru
          _
      $region60: #{tpu_custom_call.1} parent=5 // pred_fallthru
        _
    $region6: #{tpu_custom_call.1} parent=1 // loop_footer
      %s19 = sadd.s32 1, %s15
    $region7: #{tpu_custom_call.1} parent=1 // loop_footer_branch
      %14 = sbr.rel target = $region3
    $region8: #{tpu_custom_call.1} parent=1 // loop_exit
      _
    %631 = vsyncpa [#allocation5], 1
    %s632 = scalar_lea.sflag [#allocation5], 1
    %633 = vsyncpa %s632, 1

</llo_original>
